<compile_context>
chip_gen: v7x
topology: tpu7x:2x2x1
jax: 0.10.0
libtpu: 0.0.40
codegen_flags: <defaults>
</compile_context>

<pallas_src>
import functools
import math

import jax
import jax.numpy as jnp
from jax.experimental import pallas as pl
from jax.experimental.pallas import tpu as pltpu


def _round_up(x, m):
    return ((x + m - 1) // m) * m


def _sublane(dtype):
    # sublane packing granularity by element width (f32: 8, bf16: 16, int8: 32)
    return {4: 8, 2: 16, 1: 32}.get(jnp.dtype(dtype).itemsize, 8)


def _tpu_budget():
    """Returns (vmem_limit_bytes, big_chip). Generation-aware with a safe fallback."""
    cap = 128 * 1024 * 1024
    try:
        cap = int(pltpu.get_tpu_info().vmem_capacity_bytes)
    except Exception:
        pass
    big_chip = cap > 96 * 1024 * 1024          # v5e/v6e: 128 MiB, v7x: 64 MiB
    limit = max(32 * 1024 * 1024, min(cap * 3 // 4, 100 * 1024 * 1024))
    return limit, big_chip


# ---------------------------------------------------------------------------
# Linear projection kernel:  y = x @ W + b      (x tile: (tm, d_in))
# ---------------------------------------------------------------------------
def _linear_kernel(x_ref, w_ref, b_ref, o_ref):
    # Feed native dtype to the MXU; accumulate in f32.
    y = jnp.dot(x_ref[...], w_ref[...], preferred_element_type=jnp.float32)
    y = y + b_ref[...].astype(jnp.float32)
    o_ref[...] = y.astype(o_ref.dtype)


def linear(x2, w, b):
    """x2: (rows, d_in), w: (d_in, d_out), b: (d_out,) -> (rows, d_out)."""
    rows, d_in = x2.shape
    d_out = w.shape[1]
    vmem_limit, big_chip = _tpu_budget()
    sub = _sublane(x2.dtype)

    # Near-even row tiling (avoids padding a full extra tile for awkward rows).
    row_tile = 512 if big_chip else 256
    n_row = pl.cdiv(rows, row_tile)
    tm = _round_up(pl.cdiv(rows, n_row), sub)
    rows_p = n_row * tm
    if rows_p != rows:
        x2 = jnp.pad(x2, ((0, rows_p - rows), (0, 0)))

    # Tile the output (N) axis only when the resident weight would be too big.
    w_bytes = d_in * d_out * jnp.dtype(w.dtype).itemsize
    if w_bytes <= vmem_limit // 4 or d_out <= 512:
        tn = d_out
    else:
        tn = 512                                   # multiple of 128
    n_col = pl.cdiv(d_out, tn)
    d_out_p = n_col * tn
    if d_out_p != d_out:
        w = jnp.pad(w, ((0, 0), (0, d_out_p - d_out)))
        b = jnp.pad(b, ((0, d_out_p - d_out),))
    b2 = b.reshape(1, d_out_p)

    out = pl.pallas_call(
        _linear_kernel,
        out_shape=jax.ShapeDtypeStruct((rows_p, d_out_p), x2.dtype),
        grid_spec=pltpu.PrefetchScalarGridSpec(
            num_scalar_prefetch=0,
            grid=(n_row, n_col),
            in_specs=[
                pl.BlockSpec((tm, d_in), lambda i, j: (i, 0)),
                pl.BlockSpec((d_in, tn), lambda i, j: (0, j)),
                pl.BlockSpec((1, tn), lambda i, j: (0, j)),
            ],
            out_specs=pl.BlockSpec((tm, tn), lambda i, j: (i, j)),
        ),
        compiler_params=pltpu.CompilerParams(
            dimension_semantics=("parallel", "parallel"),
            vmem_limit_bytes=vmem_limit,
        ),
    )(x2, w, b2)
    if rows_p != rows or d_out_p != d_out:
        out = out[:rows, :d_out]
    return out


# ---------------------------------------------------------------------------
# Attention kernel (flash-style online softmax over the kv grid axis).
# Block layouts (heads fused via column slabs of the d_model axis):
#   q: (tq, hpb*depth)  k/v: (tk, hpb*depth)  mask: (1, tk)  out: (tq, hpb*depth)
# Scratch: running max / denom / f32 accumulator per head in the block.
# ---------------------------------------------------------------------------
def _attention_kernel(q_ref, k_ref, v_ref, m_ref, o_ref,
                      m_sc, l_sc, acc_sc, *, scale, depth, hpb):
    kv = pl.program_id(3)

    @pl.when(kv == 0)
    def _():
        m_sc[...] = jnp.full(m_sc.shape, -jnp.inf, m_sc.dtype)
        l_sc[...] = jnp.zeros(l_sc.shape, l_sc.dtype)
        acc_sc[...] = jnp.zeros(acc_sc.shape, acc_sc.dtype)

    neg = m_ref[...].astype(jnp.float32) * jnp.float32(-1e9)      # (1, tk)
    q_all = q_ref[...]
    k_all = k_ref[...]
    v_all = v_ref[...]

    for h in range(hpb):
        cols = slice(h * depth, (h + 1) * depth)
        q = q_all[:, cols] * jnp.asarray(scale, q_all.dtype)      # fold scale into q
        k = k_all[:, cols]
        v = v_all[:, cols]

        # logits = q_h @ k_h^T   -> (tq, tk) on the MXU, f32 accumulation
        s = jax.lax.dot_general(q, k, (((1,), (1,)), ((), ())),
                                preferred_element_type=jnp.float32)
        s = s + neg                                               # additive mask

        m_prev = m_sc[h]                                          # (tq, 1)
        m_new = jnp.maximum(m_prev, jnp.max(s, axis=-1, keepdims=True))
        alpha = jnp.exp(m_prev - m_new)
        p = jnp.exp(s - m_new)                                    # unnormalized weights
        l_sc[h] = alpha * l_sc[h] + jnp.sum(p, axis=-1, keepdims=True)
        acc_sc[h] = alpha * acc_sc[h] + jnp.dot(
            p.astype(v.dtype), v, preferred_element_type=jnp.float32)
        m_sc[h] = m_new

    @pl.when(kv == pl.num_programs(3) - 1)
    def _():
        outs = []
        for h in range(hpb):
            inv = pl.reciprocal(l_sc[h], approx=True)             # deferred norm (EUP)
            outs.append(acc_sc[h] * inv)
        # Single lane-dense store of the whole head-group slab.
        o_ref[...] = jnp.concatenate(outs, axis=-1).astype(o_ref.dtype)


def _pick_heads_per_block(num_heads, depth, d_model):
    """Smallest head-group whose width is >=128 lanes (or full d_model) and a
    legal BlockSpec lane width (multiple of 128 or the full last dim)."""
    target = min(128, d_model)
    for hpb in range(1, num_heads + 1):
        if num_heads % hpb:
            continue
        width = hpb * depth
        if width < target:
            continue
        if width % 128 == 0 or width == d_model:
            return hpb
    return num_heads


def _attention(q, k, v, mask, num_heads):
    """q: (B, Sq, d_model), k/v: (B, Sk, d_model), mask: (B, Sk) with 1 = masked.
    Returns the head-merged attention output (B, Sq, d_model)."""
    B, Sq, d_model = q.shape
    Sk = k.shape[1]
    depth = d_model // num_heads
    scale = 1.0 / math.sqrt(depth)
    vmem_limit, big_chip = _tpu_budget()
    sub = _sublane(q.dtype)

    hpb = _pick_heads_per_block(num_heads, depth, d_model)
    width = hpb * depth

    # Near-even query tiling.
    q_tile_max = 512 if big_chip else 256
    nq = pl.cdiv(Sq, q_tile_max)
    tq = _round_up(pl.cdiv(Sq, nq), sub)
    Sq_p = nq * tq
    if Sq_p != Sq:
        q = jnp.pad(q, ((0, 0), (0, Sq_p - Sq), (0, 0)))

    # Key/value tiles: single block for short Sk, flash-tiled otherwise.
    kv_tile_max = 1024 if big_chip else 512
    if Sk <= kv_tile_max:
        tk, nkv, Sk_p = Sk, 1, Sk
    else:
        tk = kv_tile_max                       # multiple of 128 (mask lane dim)
        nkv = pl.cdiv(Sk, tk)
        Sk_p = nkv * tk
    if Sk_p != Sk:
        k = jnp.pad(k, ((0, 0), (0, Sk_p - Sk), (0, 0)))
        v = jnp.pad(v, ((0, 0), (0, Sk_p - Sk), (0, 0)))
        mask = jnp.pad(mask, ((0, 0), (0, Sk_p - Sk)), constant_values=1.0)
    mask3 = mask.reshape(B, 1, Sk_p).astype(jnp.float32)

    kernel = functools.partial(_attention_kernel, scale=scale, depth=depth, hpb=hpb)
    out = pl.pallas_call(
        kernel,
        out_shape=jax.ShapeDtypeStruct((B, Sq_p, d_model), q.dtype),
        grid_spec=pltpu.PrefetchScalarGridSpec(
            num_scalar_prefetch=0,
            grid=(B, num_heads // hpb, nq, nkv),
            in_specs=[
                pl.BlockSpec((None, tq, width), lambda b, h, i, j: (b, i, h)),
                pl.BlockSpec((None, tk, width), lambda b, h, i, j: (b, j, h)),
                pl.BlockSpec((None, tk, width), lambda b, h, i, j: (b, j, h)),
                pl.BlockSpec((None, 1, tk), lambda b, h, i, j: (b, 0, j)),
            ],
            out_specs=pl.BlockSpec((None, tq, width),
                                   lambda b, h, i, j: (b, i, h)),
            scratch_shapes=[
                pltpu.VMEM((hpb, tq, 1), jnp.float32),      # running max
                pltpu.VMEM((hpb, tq, 1), jnp.float32),      # running denom
                pltpu.VMEM((hpb, tq, depth), jnp.float32),  # accumulator
            ],
        ),
        compiler_params=pltpu.CompilerParams(
            dimension_semantics=("parallel", "parallel", "parallel", "arbitrary"),
            vmem_limit_bytes=vmem_limit,
        ),
    )(q, k, v, mask3)
    if Sq_p != Sq:
        out = out[:, :Sq, :]
    return out


# ---------------------------------------------------------------------------
# Full MultiHeadAttention forward (matches the PyTorch module semantics;
# weights are stored as (d_in, d_out), i.e. the transpose of nn.Linear.weight).
# ---------------------------------------------------------------------------
def multi_head_attention(query, key, value, mask, params, *, num_heads):
    B, Sq, d_model = query.shape
    Sk = key.shape[1]

    q = linear(query.reshape(B * Sq, d_model), params["wq"], params["bq"])
    k = linear(key.reshape(B * Sk, d_model), params["wk"], params["bk"])
    v = linear(value.reshape(B * Sk, d_model), params["wv"], params["bv"])

    q = q.reshape(B, Sq, d_model)
    k = k.reshape(B, Sk, d_model)
    v = v.reshape(B, Sk, d_model)

    # Head split / merge fused into the attention BlockSpecs (no transposes).
    attn = _attention(q, k, v, mask, num_heads)          # (B, Sq, d_model)

    out = linear(attn.reshape(B * Sq, d_model), params["wo"], params["bo"])
    return out.reshape(B, Sq, d_model)


# ---------------------------------------------------------------------------
# Pure-JAX reference (high precision) for verification.
# ---------------------------------------------------------------------------
def _reference(query, key, value, mask, params, num_heads):
    B, Sq, d_model = query.shape
    Sk = key.shape[1]
    depth = d_model // num_heads
    hp = jax.lax.Precision.HIGHEST

    def lin(x, w, b):
        return jnp.dot(x, w, precision=hp) + b

    q = lin(query, params["wq"], params["bq"]).reshape(
        B, Sq, num_heads, depth).transpose(0, 2, 1, 3)
    k = lin(key, params["wk"], params["bk"]).reshape(
        B, Sk, num_heads, depth).transpose(0, 2, 1, 3)
    v = lin(value, params["wv"], params["bv"]).reshape(
        B, Sk, num_heads, depth).transpose(0, 2, 1, 3)

    logits = jnp.einsum("bhqd,bhkd->bhqk", q, k, precision=hp)
    logits = logits / jnp.sqrt(jnp.float32(depth))
    logits = logits + mask[:, None, None, :].astype(jnp.float32) * (-1e9)
    w = jax.nn.softmax(logits, axis=-1)
    out = jnp.einsum("bhqk,bhkd->bhqd", w, v, precision=hp)
    out = out.transpose(0, 2, 1, 3).reshape(B, Sq, d_model)
    return lin(out, params["wo"], params["bo"])


if __name__ == "__main__":
    batch, seq, d_model, num_heads = 2, 8, 32, 4

    root = jax.random.PRNGKey(0)
    keys = jax.random.split(root, 12)
    wscale = 1.0 / (d_model ** 0.5)

    query = jax.random.normal(keys[0], (batch, seq, d_model), jnp.float32)
    key_in = jax.random.normal(keys[1], (batch, seq, d_model), jnp.float32)
    value_in = jax.random.normal(keys[2], (batch, seq, d_model), jnp.float32)
    # mask == 1.0 -> position is masked out (matches `mask * -1e9` in the spec)
    mask = (jax.random.uniform(keys[3], (batch, seq)) > 0.7).astype(jnp.float32)

    params = {
        "wq": jax.random.normal(keys[4], (d_model, d_model), jnp.float32) * wscale,
        "bq": jax.random.normal(keys[5], (d_model,), jnp.float32) * 0.1,
        "wk": jax.random.normal(keys[6], (d_model, d_model), jnp.float32) * wscale,
        "bk": jax.random.normal(keys[7], (d_model,), jnp.float32) * 0.1,
        "wv": jax.random.normal(keys[8], (d_model, d_model), jnp.float32) * wscale,
        "bv": jax.random.normal(keys[9], (d_model,), jnp.float32) * 0.1,
        "wo": jax.random.normal(keys[10], (d_model, d_model), jnp.float32) * wscale,
        "bo": jax.random.normal(keys[11], (d_model,), jnp.float32) * 0.1,
    }

    mha = jax.jit(functools.partial(multi_head_attention, num_heads=num_heads))
    out = mha(query, key_in, value_in, mask, params)
    out = jax.block_until_ready(out)

    ref = _reference(query, key_in, value_in, mask, params, num_heads)
    assert out.shape == (batch, seq, d_model) and out.dtype == jnp.float32
    # Tolerance covers default (bf16-pass) MXU precision + approx reciprocal
    # vs the HIGHEST-precision reference.
    assert jnp.allclose(out, ref, atol=2e-2, rtol=2e-2), "mismatch vs reference"

    print("KERNEL_OK")
</pallas_src>

<mosaic_0001>
module attributes {stable_mosaic.version = 11 : i64} {
  func.func @_linear_kernel(%arg0: i32, %arg1: i32, %arg2: memref<16x32xf32, #tpu.memory_space<vmem>>, %arg3: memref<32x32xf32, #tpu.memory_space<vmem>>, %arg4: memref<1x32xf32, #tpu.memory_space<vmem>>, %arg5: memref<16x32xf32, #tpu.memory_space<vmem>>) attributes {dimension_semantics = [#tpu.dimension_semantics<parallel>, #tpu.dimension_semantics<parallel>], iteration_bounds = array<i64: 1, 1>, scalar_prefetch = 0 : i64, scratch_operands = 0 : i64, tpu.core_type = #tpu.core_type<tc>, window_params = [{transform_indices = @transform_0, window_bounds = array<i64: 16, 32>}, {transform_indices = @transform_1, window_bounds = array<i64: 32, 32>}, {transform_indices = @transform_2, window_bounds = array<i64: 1, 32>}, {transform_indices = @transform_3, window_bounds = array<i64: 16, 32>}]} {
    %c0 = arith.constant 0 : index
    %c0_0 = arith.constant 0 : index
    %0 = vector.load %arg2[%c0, %c0_0] : memref<16x32xf32, #tpu.memory_space<vmem>>, vector<16x32xf32>
    %c0_1 = arith.constant 0 : index
    %c0_2 = arith.constant 0 : index
    %1 = vector.load %arg3[%c0_1, %c0_2] : memref<32x32xf32, #tpu.memory_space<vmem>>, vector<32x32xf32>
    %cst = arith.constant dense<0.000000e+00> : vector<16x32xf32>
    %2 = tpu.matmul %0, %1, %cst {dimension_numbers = #tpu.dot_dimension_numbers<[1], [0], [0], [1], [0, 0, 1, 1], [], []>} : vector<16x32xf32>, vector<32x32xf32>, vector<16x32xf32> -> vector<16x32xf32>
    %c0_3 = arith.constant 0 : index
    %c0_4 = arith.constant 0 : index
    %3 = vector.load %arg4[%c0_3, %c0_4] : memref<1x32xf32, #tpu.memory_space<vmem>>, vector<1x32xf32>
    %4 = vector.broadcast %3 : vector<1x32xf32> to vector<16x32xf32>
    %5 = arith.addf %2, %4 : vector<16x32xf32>
    %c0_5 = arith.constant 0 : index
    %c0_6 = arith.constant 0 : index
    %6 = vector.load %arg5[%c0_5, %c0_6] : memref<16x32xf32, #tpu.memory_space<vmem>>, vector<16x32xf32>
    tpu.vector_store %arg5[%c0_5, %c0_6], %5 {strides = array<i32>} : memref<16x32xf32, #tpu.memory_space<vmem>>, vector<16x32xf32>,
    return
  }
  func.func @transform_0(%arg0: i32, %arg1: i32) -> (i32, i32) {
    %c0_i32 = arith.constant 0 : i32
    %c0_i32_0 = arith.constant 0 : i32
    return %arg0, %c0_i32 : i32, i32
  }
  func.func @transform_1(%arg0: i32, %arg1: i32) -> (i32, i32) {
    %c0_i32 = arith.constant 0 : i32
    %c0_i32_0 = arith.constant 0 : i32
    return %c0_i32, %arg1 : i32, i32
  }
  func.func @transform_2(%arg0: i32, %arg1: i32) -> (i32, i32) {
    %c0_i32 = arith.constant 0 : i32
    %c0_i32_0 = arith.constant 0 : i32
    return %c0_i32, %arg1 : i32, i32
  }
  func.func @transform_3(%arg0: i32, %arg1: i32) -> (i32, i32) {
    %c0_i32 = arith.constant 0 : i32
    return %arg0, %arg1 : i32, i32
  }
}

module attributes {stable_mosaic.version = 11 : i64} {
  func.func @_attention_kernel(%arg0: i32, %arg1: i32, %arg2: i32, %arg3: i32, %arg4: memref<1x8x32xf32, #tpu.memory_space<vmem>>, %arg5: memref<1x8x32xf32, #tpu.memory_space<vmem>>, %arg6: memref<1x8x32xf32, #tpu.memory_space<vmem>>, %arg7: memref<1x1x8xf32, #tpu.memory_space<vmem>>, %arg8: memref<1x8x32xf32, #tpu.memory_space<vmem>>, %arg9: memref<4x8x1xf32, #tpu.memory_space<vmem>>, %arg10: memref<4x8x1xf32, #tpu.memory_space<vmem>>, %arg11: memref<4x8x8xf32, #tpu.memory_space<vmem>>) attributes {dimension_semantics = [#tpu.dimension_semantics<parallel>, #tpu.dimension_semantics<parallel>, #tpu.dimension_semantics<parallel>, #tpu.dimension_semantics<arbitrary>], iteration_bounds = array<i64: 2, 1, 1, 1>, scalar_prefetch = 0 : i64, scratch_operands = 3 : i64, tpu.core_type = #tpu.core_type<tc>, window_params = [{transform_indices = @transform_0, window_bounds = array<i64: 1, 8, 32>}, {transform_indices = @transform_1, window_bounds = array<i64: 1, 8, 32>}, {transform_indices = @transform_2, window_bounds = array<i64: 1, 8, 32>}, {transform_indices = @transform_3, window_bounds = array<i64: 1, 1, 8>}, {transform_indices = @transform_4, window_bounds = array<i64: 1, 8, 32>}]} {
    %c0_i32 = arith.constant 0 : i32
    %0 = arith.cmpi eq, %arg3, %c0_i32 : i32
    %1 = arith.extui %0 : i1 to i32
    %c0_i32_0 = arith.constant 0 : i32
    %2 = arith.cmpi ne, %1, %c0_i32_0 : i32
    scf.if %2 {
      %cst_103 = arith.constant 0xFF800000 : f32
      %172 = vector.broadcast %cst_103 : f32 to vector<4x8x1xf32>
      %c0_104 = arith.constant 0 : index
      %c0_105 = arith.constant 0 : index
      %c0_106 = arith.constant 0 : index
      %173 = vector.load %arg9[%c0_104, %c0_105, %c0_106] : memref<4x8x1xf32, #tpu.memory_space<vmem>>, vector<4x8x1xf32>
      tpu.vector_store %arg9[%c0_104, %c0_105, %c0_106], %172 {strides = array<i32>} : memref<4x8x1xf32, #tpu.memory_space<vmem>>, vector<4x8x1xf32>,
      %cst_107 = arith.constant 0.000000e+00 : f32
      %174 = vector.broadcast %cst_107 : f32 to vector<4x8x1xf32>
      %c0_108 = arith.constant 0 : index
      %c0_109 = arith.constant 0 : index
      %c0_110 = arith.constant 0 : index
      %175 = vector.load %arg10[%c0_108, %c0_109, %c0_110] : memref<4x8x1xf32, #tpu.memory_space<vmem>>, vector<4x8x1xf32>
      tpu.vector_store %arg10[%c0_108, %c0_109, %c0_110], %174 {strides = array<i32>} : memref<4x8x1xf32, #tpu.memory_space<vmem>>, vector<4x8x1xf32>,
      %cst_111 = arith.constant 0.000000e+00 : f32
      %176 = vector.broadcast %cst_111 : f32 to vector<4x8x8xf32>
      %c0_112 = arith.constant 0 : index
      %c0_113 = arith.constant 0 : index
      %c0_114 = arith.constant 0 : index
      %177 = vector.load %arg11[%c0_112, %c0_113, %c0_114] : memref<4x8x8xf32, #tpu.memory_space<vmem>>, vector<4x8x8xf32>
      tpu.vector_store %arg11[%c0_112, %c0_113, %c0_114], %176 {strides = array<i32>} : memref<4x8x8xf32, #tpu.memory_space<vmem>>, vector<4x8x8xf32>,
    } else {
    }
    %c0 = arith.constant 0 : index
    %c0_1 = arith.constant 0 : index
    %c0_2 = arith.constant 0 : index
    %3 = vector.load %arg7[%c0, %c0_1, %c0_2] : memref<1x1x8xf32, #tpu.memory_space<vmem>>, vector<1x1x8xf32>
    %4 = vector.shape_cast %3 : vector<1x1x8xf32> to vector<1x8xf32>
    %cst = arith.constant -1.000000e+09 : f32
    %5 = vector.broadcast %cst : f32 to vector<1x8xf32>
    %6 = arith.mulf %4, %5 : vector<1x8xf32>
    %c0_3 = arith.constant 0 : index
    %c0_4 = arith.constant 0 : index
    %c0_5 = arith.constant 0 : index
    %7 = vector.load %arg4[%c0_3, %c0_4, %c0_5] : memref<1x8x32xf32, #tpu.memory_space<vmem>>, vector<1x8x32xf32>
    %8 = vector.shape_cast %7 : vector<1x8x32xf32> to vector<8x32xf32>
    %c0_6 = arith.constant 0 : index
    %c0_7 = arith.constant 0 : index
    %c0_8 = arith.constant 0 : index
    %9 = vector.load %arg5[%c0_6, %c0_7, %c0_8] : memref<1x8x32xf32, #tpu.memory_space<vmem>>, vector<1x8x32xf32>
    %10 = vector.shape_cast %9 : vector<1x8x32xf32> to vector<8x32xf32>
    %c0_9 = arith.constant 0 : index
    %c0_10 = arith.constant 0 : index
    %c0_11 = arith.constant 0 : index
    %11 = vector.load %arg6[%c0_9, %c0_10, %c0_11] : memref<1x8x32xf32, #tpu.memory_space<vmem>>, vector<1x8x32xf32>
    %12 = vector.shape_cast %11 : vector<1x8x32xf32> to vector<8x32xf32>
    %13 = vector.extract_strided_slice %8 {offsets = [0, 0], sizes = [8, 8], strides = [1, 1]} : vector<8x32xf32> to vector<8x8xf32>
    %cst_12 = arith.constant 0.353553385 : f32
    %14 = vector.broadcast %cst_12 : f32 to vector<8x8xf32>
    %15 = arith.mulf %13, %14 : vector<8x8xf32>
    %16 = vector.extract_strided_slice %10 {offsets = [0, 0], sizes = [8, 8], strides = [1, 1]} : vector<8x32xf32> to vector<8x8xf32>
    %17 = vector.extract_strided_slice %12 {offsets = [0, 0], sizes = [8, 8], strides = [1, 1]} : vector<8x32xf32> to vector<8x8xf32>
    %cst_13 = arith.constant dense<0.000000e+00> : vector<8x8xf32>
    %18 = tpu.matmul %15, %16, %cst_13 {dimension_numbers = #tpu.dot_dimension_numbers<[1], [1], [0], [0], [0, 0, 1, 0], [], []>} : vector<8x8xf32>, vector<8x8xf32>, vector<8x8xf32> -> vector<8x8xf32>
    %19 = vector.broadcast %6 : vector<1x8xf32> to vector<8x8xf32>
    %20 = arith.addf %18, %19 : vector<8x8xf32>
    %c0_14 = arith.constant 0 : index
    %c0_15 = arith.constant 0 : index
    %c0_16 = arith.constant 0 : index
    %21 = vector.load %arg9[%c0_14, %c0_15, %c0_16] : memref<4x8x1xf32, #tpu.memory_space<vmem>>, vector<1x8x1xf32>
    %22 = vector.shape_cast %21 : vector<1x8x1xf32> to vector<8x1xf32>
    %cst_17 = arith.constant dense<0xFF800000> : vector<8xf32>
    %23 = vector.multi_reduction <maximumf>, %20, %cst_17 [1] : vector<8x8xf32> to vector<8xf32>
    %24 = vector.shape_cast %23 : vector<8xf32> to vector<8x1xf32>
    %25 = arith.maximumf %22, %24 : vector<8x1xf32>
    %26 = arith.subf %22, %25 : vector<8x1xf32>
    %27 = math.exp %26 : vector<8x1xf32>
    %28 = vector.broadcast %25 : vector<8x1xf32> to vector<8x8xf32>
    %29 = arith.subf %20, %28 : vector<8x8xf32>
    %30 = math.exp %29 : vector<8x8xf32>
    %c0_18 = arith.constant 0 : index
    %c0_19 = arith.constant 0 : index
    %c0_20 = arith.constant 0 : index
    %31 = vector.load %arg10[%c0_18, %c0_19, %c0_20] : memref<4x8x1xf32, #tpu.memory_space<vmem>>, vector<1x8x1xf32>
    %32 = vector.shape_cast %31 : vector<1x8x1xf32> to vector<8x1xf32>
    %33 = arith.mulf %27, %32 : vector<8x1xf32>
    %cst_21 = arith.constant dense<0.000000e+00> : vector<8xf32>
    %34 = vector.multi_reduction <add>, %30, %cst_21 [1] : vector<8x8xf32> to vector<8xf32>
    %35 = vector.shape_cast %34 : vector<8xf32> to vector<8x1xf32>
    %36 = arith.addf %33, %35 : vector<8x1xf32>
    %c0_22 = arith.constant 0 : index
    %c0_23 = arith.constant 0 : index
    %c0_24 = arith.constant 0 : index
    %37 = vector.load %arg10[%c0_22, %c0_23, %c0_24] : memref<4x8x1xf32, #tpu.memory_space<vmem>>, vector<1x8x1xf32>
    %38 = vector.shape_cast %37 : vector<1x8x1xf32> to vector<8x1xf32>
    %39 = vector.shape_cast %36 : vector<8x1xf32> to vector<1x8x1xf32>
    tpu.vector_store %arg10[%c0_22, %c0_23, %c0_24], %39 {strides = array<i32>} : memref<4x8x1xf32, #tpu.memory_space<vmem>>, vector<1x8x1xf32>,
    %c0_25 = arith.constant 0 : index
    %c0_26 = arith.constant 0 : index
    %c0_27 = arith.constant 0 : index
    %40 = vector.load %arg11[%c0_25, %c0_26, %c0_27] : memref<4x8x8xf32, #tpu.memory_space<vmem>>, vector<1x8x8xf32>
    %41 = vector.shape_cast %40 : vector<1x8x8xf32> to vector<8x8xf32>
    %42 = vector.broadcast %27 : vector<8x1xf32> to vector<8x8xf32>
    %43 = arith.mulf %42, %41 : vector<8x8xf32>
    %cst_28 = arith.constant dense<0.000000e+00> : vector<8x8xf32>
    %44 = tpu.matmul %30, %17, %cst_28 {dimension_numbers = #tpu.dot_dimension_numbers<[1], [0], [0], [1], [0, 0, 1, 1], [], []>} : vector<8x8xf32>, vector<8x8xf32>, vector<8x8xf32> -> vector<8x8xf32>
    %45 = arith.addf %43, %44 : vector<8x8xf32>
    %c0_29 = arith.constant 0 : index
    %c0_30 = arith.constant 0 : index
    %c0_31 = arith.constant 0 : index
    %46 = vector.load %arg11[%c0_29, %c0_30, %c0_31] : memref<4x8x8xf32, #tpu.memory_space<vmem>>, vector<1x8x8xf32>
    %47 = vector.shape_cast %46 : vector<1x8x8xf32> to vector<8x8xf32>
    %48 = vector.shape_cast %45 : vector<8x8xf32> to vector<1x8x8xf32>
    tpu.vector_store %arg11[%c0_29, %c0_30, %c0_31], %48 {strides = array<i32>} : memref<4x8x8xf32, #tpu.memory_space<vmem>>, vector<1x8x8xf32>,
    %c0_32 = arith.constant 0 : index
    %c0_33 = arith.constant 0 : index
    %c0_34 = arith.constant 0 : index
    %49 = vector.load %arg9[%c0_32, %c0_33, %c0_34] : memref<4x8x1xf32, #tpu.memory_space<vmem>>, vector<1x8x1xf32>
    %50 = vector.shape_cast %49 : vector<1x8x1xf32> to vector<8x1xf32>
    %51 = vector.shape_cast %25 : vector<8x1xf32> to vector<1x8x1xf32>
    tpu.vector_store %arg9[%c0_32, %c0_33, %c0_34], %51 {strides = array<i32>} : memref<4x8x1xf32, #tpu.memory_space<vmem>>, vector<1x8x1xf32>,
    %52 = vector.extract_strided_slice %8 {offsets = [0, 8], sizes = [8, 8], strides = [1, 1]} : vector<8x32xf32> to vector<8x8xf32>
    %cst_35 = arith.constant 0.353553385 : f32
    %53 = vector.broadcast %cst_35 : f32 to vector<8x8xf32>
    %54 = arith.mulf %52, %53 : vector<8x8xf32>
    %55 = vector.extract_strided_slice %10 {offsets = [0, 8], sizes = [8, 8], strides = [1, 1]} : vector<8x32xf32> to vector<8x8xf32>
    %56 = vector.extract_strided_slice %12 {offsets = [0, 8], sizes = [8, 8], strides = [1, 1]} : vector<8x32xf32> to vector<8x8xf32>
    %cst_36 = arith.constant dense<0.000000e+00> : vector<8x8xf32>
    %57 = tpu.matmul %54, %55, %cst_36 {dimension_numbers = #tpu.dot_dimension_numbers<[1], [1], [0], [0], [0, 0, 1, 0], [], []>} : vector<8x8xf32>, vector<8x8xf32>, vector<8x8xf32> -> vector<8x8xf32>
    %58 = vector.broadcast %6 : vector<1x8xf32> to vector<8x8xf32>
    %59 = arith.addf %57, %58 : vector<8x8xf32>
    %c1 = arith.constant 1 : index
    %c0_37 = arith.constant 0 : index
    %c0_38 = arith.constant 0 : index
    %60 = vector.load %arg9[%c1, %c0_37, %c0_38] : memref<4x8x1xf32, #tpu.memory_space<vmem>>, vector<1x8x1xf32>
    %61 = vector.shape_cast %60 : vector<1x8x1xf32> to vector<8x1xf32>
    %cst_39 = arith.constant dense<0xFF800000> : vector<8xf32>
    %62 = vector.multi_reduction <maximumf>, %59, %cst_39 [1] : vector<8x8xf32> to vector<8xf32>
    %63 = vector.shape_cast %62 : vector<8xf32> to vector<8x1xf32>
    %64 = arith.maximumf %61, %63 : vector<8x1xf32>
    %65 = arith.subf %61, %64 : vector<8x1xf32>
    %66 = math.exp %65 : vector<8x1xf32>
    %67 = vector.broadcast %64 : vector<8x1xf32> to vector<8x8xf32>
    %68 = arith.subf %59, %67 : vector<8x8xf32>
    %69 = math.exp %68 : vector<8x8xf32>
    %c1_40 = arith.constant 1 : index
    %c0_41 = arith.constant 0 : index
    %c0_42 = arith.constant 0 : index
    %70 = vector.load %arg10[%c1_40, %c0_41, %c0_42] : memref<4x8x1xf32, #tpu.memory_space<vmem>>, vector<1x8x1xf32>
    %71 = vector.shape_cast %70 : vector<1x8x1xf32> to vector<8x1xf32>
    %72 = arith.mulf %66, %71 : vector<8x1xf32>
    %cst_43 = arith.constant dense<0.000000e+00> : vector<8xf32>
    %73 = vector.multi_reduction <add>, %69, %cst_43 [1] : vector<8x8xf32> to vector<8xf32>
    %74 = vector.shape_cast %73 : vector<8xf32> to vector<8x1xf32>
    %75 = arith.addf %72, %74 : vector<8x1xf32>
    %c1_44 = arith.constant 1 : index
    %c0_45 = arith.constant 0 : index
    %c0_46 = arith.constant 0 : index
    %76 = vector.load %arg10[%c1_44, %c0_45, %c0_46] : memref<4x8x1xf32, #tpu.memory_space<vmem>>, vector<1x8x1xf32>
    %77 = vector.shape_cast %76 : vector<1x8x1xf32> to vector<8x1xf32>
    %78 = vector.shape_cast %75 : vector<8x1xf32> to vector<1x8x1xf32>
    tpu.vector_store %arg10[%c1_44, %c0_45, %c0_46], %78 {strides = array<i32>} : memref<4x8x1xf32, #tpu.memory_space<vmem>>, vector<1x8x1xf32>,
    %c1_47 = arith.constant 1 : index
    %c0_48 = arith.constant 0 : index
    %c0_49 = arith.constant 0 : index
    %79 = vector.load %arg11[%c1_47, %c0_48, %c0_49] : memref<4x8x8xf32, #tpu.memory_space<vmem>>, vector<1x8x8xf32>
    %80 = vector.shape_cast %79 : vector<1x8x8xf32> to vector<8x8xf32>
    %81 = vector.broadcast %66 : vector<8x1xf32> to vector<8x8xf32>
    %82 = arith.mulf %81, %80 : vector<8x8xf32>
    %cst_50 = arith.constant dense<0.000000e+00> : vector<8x8xf32>
    %83 = tpu.matmul %69, %56, %cst_50 {dimension_numbers = #tpu.dot_dimension_numbers<[1], [0], [0], [1], [0, 0, 1, 1], [], []>} : vector<8x8xf32>, vector<8x8xf32>, vector<8x8xf32> -> vector<8x8xf32>
    %84 = arith.addf %82, %83 : vector<8x8xf32>
    %c1_51 = arith.constant 1 : index
    %c0_52 = arith.constant 0 : index
    %c0_53 = arith.constant 0 : index
    %85 = vector.load %arg11[%c1_51, %c0_52, %c0_53] : memref<4x8x8xf32, #tpu.memory_space<vmem>>, vector<1x8x8xf32>
    %86 = vector.shape_cast %85 : vector<1x8x8xf32> to vector<8x8xf32>
    %87 = vector.shape_cast %84 : vector<8x8xf32> to vector<1x8x8xf32>
    tpu.vector_store %arg11[%c1_51, %c0_52, %c0_53], %87 {strides = array<i32>} : memref<4x8x8xf32, #tpu.memory_space<vmem>>, vector<1x8x8xf32>,
    %c1_54 = arith.constant 1 : index
    %c0_55 = arith.constant 0 : index
    %c0_56 = arith.constant 0 : index
    %88 = vector.load %arg9[%c1_54, %c0_55, %c0_56] : memref<4x8x1xf32, #tpu.memory_space<vmem>>, vector<1x8x1xf32>
    %89 = vector.shape_cast %88 : vector<1x8x1xf32> to vector<8x1xf32>
    %90 = vector.shape_cast %64 : vector<8x1xf32> to vector<1x8x1xf32>
    tpu.vector_store %arg9[%c1_54, %c0_55, %c0_56], %90 {strides = array<i32>} : memref<4x8x1xf32, #tpu.memory_space<vmem>>, vector<1x8x1xf32>,
    %91 = vector.extract_strided_slice %8 {offsets = [0, 16], sizes = [8, 8], strides = [1, 1]} : vector<8x32xf32> to vector<8x8xf32>
    %cst_57 = arith.constant 0.353553385 : f32
    %92 = vector.broadcast %cst_57 : f32 to vector<8x8xf32>
    %93 = arith.mulf %91, %92 : vector<8x8xf32>
    %94 = vector.extract_strided_slice %10 {offsets = [0, 16], sizes = [8, 8], strides = [1, 1]} : vector<8x32xf32> to vector<8x8xf32>
    %95 = vector.extract_strided_slice %12 {offsets = [0, 16], sizes = [8, 8], strides = [1, 1]} : vector<8x32xf32> to vector<8x8xf32>
    %cst_58 = arith.constant dense<0.000000e+00> : vector<8x8xf32>
    %96 = tpu.matmul %93, %94, %cst_58 {dimension_numbers = #tpu.dot_dimension_numbers<[1], [1], [0], [0], [0, 0, 1, 0], [], []>} : vector<8x8xf32>, vector<8x8xf32>, vector<8x8xf32> -> vector<8x8xf32>
    %97 = vector.broadcast %6 : vector<1x8xf32> to vector<8x8xf32>
    %98 = arith.addf %96, %97 : vector<8x8xf32>
    %c2 = arith.constant 2 : index
    %c0_59 = arith.constant 0 : index
    %c0_60 = arith.constant 0 : index
    %99 = vector.load %arg9[%c2, %c0_59, %c0_60] : memref<4x8x1xf32, #tpu.memory_space<vmem>>, vector<1x8x1xf32>
    %100 = vector.shape_cast %99 : vector<1x8x1xf32> to vector<8x1xf32>
    %cst_61 = arith.constant dense<0xFF800000> : vector<8xf32>
    %101 = vector.multi_reduction <maximumf>, %98, %cst_61 [1] : vector<8x8xf32> to vector<8xf32>
    %102 = vector.shape_cast %101 : vector<8xf32> to vector<8x1xf32>
    %103 = arith.maximumf %100, %102 : vector<8x1xf32>
    %104 = arith.subf %100, %103 : vector<8x1xf32>
    %105 = math.exp %104 : vector<8x1xf32>
    %106 = vector.broadcast %103 : vector<8x1xf32> to vector<8x8xf32>
    %107 = arith.subf %98, %106 : vector<8x8xf32>
    %108 = math.exp %107 : vector<8x8xf32>
    %c2_62 = arith.constant 2 : index
    %c0_63 = arith.constant 0 : index
    %c0_64 = arith.constant 0 : index
    %109 = vector.load %arg10[%c2_62, %c0_63, %c0_64] : memref<4x8x1xf32, #tpu.memory_space<vmem>>, vector<1x8x1xf32>
    %110 = vector.shape_cast %109 : vector<1x8x1xf32> to vector<8x1xf32>
    %111 = arith.mulf %105, %110 : vector<8x1xf32>
    %cst_65 = arith.constant dense<0.000000e+00> : vector<8xf32>
    %112 = vector.multi_reduction <add>, %108, %cst_65 [1] : vector<8x8xf32> to vector<8xf32>
    %113 = vector.shape_cast %112 : vector<8xf32> to vector<8x1xf32>
    %114 = arith.addf %111, %113 : vector<8x1xf32>
    %c2_66 = arith.constant 2 : index
    %c0_67 = arith.constant 0 : index
    %c0_68 = arith.constant 0 : index
    %115 = vector.load %arg10[%c2_66, %c0_67, %c0_68] : memref<4x8x1xf32, #tpu.memory_space<vmem>>, vector<1x8x1xf32>
    %116 = vector.shape_cast %115 : vector<1x8x1xf32> to vector<8x1xf32>
    %117 = vector.shape_cast %114 : vector<8x1xf32> to vector<1x8x1xf32>
    tpu.vector_store %arg10[%c2_66, %c0_67, %c0_68], %117 {strides = array<i32>} : memref<4x8x1xf32, #tpu.memory_space<vmem>>, vector<1x8x1xf32>,
    %c2_69 = arith.constant 2 : index
    %c0_70 = arith.constant 0 : index
    %c0_71 = arith.constant 0 : index
    %118 = vector.load %arg11[%c2_69, %c0_70, %c0_71] : memref<4x8x8xf32, #tpu.memory_space<vmem>>, vector<1x8x8xf32>
    %119 = vector.shape_cast %118 : vector<1x8x8xf32> to vector<8x8xf32>
    %120 = vector.broadcast %105 : vector<8x1xf32> to vector<8x8xf32>
    %121 = arith.mulf %120, %119 : vector<8x8xf32>
    %cst_72 = arith.constant dense<0.000000e+00> : vector<8x8xf32>
    %122 = tpu.matmul %108, %95, %cst_72 {dimension_numbers = #tpu.dot_dimension_numbers<[1], [0], [0], [1], [0, 0, 1, 1], [], []>} : vector<8x8xf32>, vector<8x8xf32>, vector<8x8xf32> -> vector<8x8xf32>
    %123 = arith.addf %121, %122 : vector<8x8xf32>
    %c2_73 = arith.constant 2 : index
    %c0_74 = arith.constant 0 : index
    %c0_75 = arith.constant 0 : index
    %124 = vector.load %arg11[%c2_73, %c0_74, %c0_75] : memref<4x8x8xf32, #tpu.memory_space<vmem>>, vector<1x8x8xf32>
    %125 = vector.shape_cast %124 : vector<1x8x8xf32> to vector<8x8xf32>
    %126 = vector.shape_cast %123 : vector<8x8xf32> to vector<1x8x8xf32>
    tpu.vector_store %arg11[%c2_73, %c0_74, %c0_75], %126 {strides = array<i32>} : memref<4x8x8xf32, #tpu.memory_space<vmem>>, vector<1x8x8xf32>,
    %c2_76 = arith.constant 2 : index
    %c0_77 = arith.constant 0 : index
    %c0_78 = arith.constant 0 : index
    %127 = vector.load %arg9[%c2_76, %c0_77, %c0_78] : memref<4x8x1xf32, #tpu.memory_space<vmem>>, vector<1x8x1xf32>
    %128 = vector.shape_cast %127 : vector<1x8x1xf32> to vector<8x1xf32>
    %129 = vector.shape_cast %103 : vector<8x1xf32> to vector<1x8x1xf32>
    tpu.vector_store %arg9[%c2_76, %c0_77, %c0_78], %129 {strides = array<i32>} : memref<4x8x1xf32, #tpu.memory_space<vmem>>, vector<1x8x1xf32>,
    %130 = vector.extract_strided_slice %8 {offsets = [0, 24], sizes = [8, 8], strides = [1, 1]} : vector<8x32xf32> to vector<8x8xf32>
    %cst_79 = arith.constant 0.353553385 : f32
    %131 = vector.broadcast %cst_79 : f32 to vector<8x8xf32>
    %132 = arith.mulf %130, %131 : vector<8x8xf32>
    %133 = vector.extract_strided_slice %10 {offsets = [0, 24], sizes = [8, 8], strides = [1, 1]} : vector<8x32xf32> to vector<8x8xf32>
    %134 = vector.extract_strided_slice %12 {offsets = [0, 24], sizes = [8, 8], strides = [1, 1]} : vector<8x32xf32> to vector<8x8xf32>
    %cst_80 = arith.constant dense<0.000000e+00> : vector<8x8xf32>
    %135 = tpu.matmul %132, %133, %cst_80 {dimension_numbers = #tpu.dot_dimension_numbers<[1], [1], [0], [0], [0, 0, 1, 0], [], []>} : vector<8x8xf32>, vector<8x8xf32>, vector<8x8xf32> -> vector<8x8xf32>
    %136 = vector.broadcast %6 : vector<1x8xf32> to vector<8x8xf32>
    %137 = arith.addf %135, %136 : vector<8x8xf32>
    %c3 = arith.constant 3 : index
    %c0_81 = arith.constant 0 : index
    %c0_82 = arith.constant 0 : index
    %138 = vector.load %arg9[%c3, %c0_81, %c0_82] : memref<4x8x1xf32, #tpu.memory_space<vmem>>, vector<1x8x1xf32>
    %139 = vector.shape_cast %138 : vector<1x8x1xf32> to vector<8x1xf32>
    %cst_83 = arith.constant dense<0xFF800000> : vector<8xf32>
    %140 = vector.multi_reduction <maximumf>, %137, %cst_83 [1] : vector<8x8xf32> to vector<8xf32>
    %141 = vector.shape_cast %140 : vector<8xf32> to vector<8x1xf32>
    %142 = arith.maximumf %139, %141 : vector<8x1xf32>
    %143 = arith.subf %139, %142 : vector<8x1xf32>
    %144 = math.exp %143 : vector<8x1xf32>
    %145 = vector.broadcast %142 : vector<8x1xf32> to vector<8x8xf32>
    %146 = arith.subf %137, %145 : vector<8x8xf32>
    %147 = math.exp %146 : vector<8x8xf32>
    %c3_84 = arith.constant 3 : index
    %c0_85 = arith.constant 0 : index
    %c0_86 = arith.constant 0 : index
    %148 = vector.load %arg10[%c3_84, %c0_85, %c0_86] : memref<4x8x1xf32, #tpu.memory_space<vmem>>, vector<1x8x1xf32>
    %149 = vector.shape_cast %148 : vector<1x8x1xf32> to vector<8x1xf32>
    %150 = arith.mulf %144, %149 : vector<8x1xf32>
    %cst_87 = arith.constant dense<0.000000e+00> : vector<8xf32>
    %151 = vector.multi_reduction <add>, %147, %cst_87 [1] : vector<8x8xf32> to vector<8xf32>
    %152 = vector.shape_cast %151 : vector<8xf32> to vector<8x1xf32>
    %153 = arith.addf %150, %152 : vector<8x1xf32>
    %c3_88 = arith.constant 3 : index
    %c0_89 = arith.constant 0 : index
    %c0_90 = arith.constant 0 : index
    %154 = vector.load %arg10[%c3_88, %c0_89, %c0_90] : memref<4x8x1xf32, #tpu.memory_space<vmem>>, vector<1x8x1xf32>
    %155 = vector.shape_cast %154 : vector<1x8x1xf32> to vector<8x1xf32>
    %156 = vector.shape_cast %153 : vector<8x1xf32> to vector<1x8x1xf32>
    tpu.vector_store %arg10[%c3_88, %c0_89, %c0_90], %156 {strides = array<i32>} : memref<4x8x1xf32, #tpu.memory_space<vmem>>, vector<1x8x1xf32>,
    %c3_91 = arith.constant 3 : index
    %c0_92 = arith.constant 0 : index
    %c0_93 = arith.constant 0 : index
    %157 = vector.load %arg11[%c3_91, %c0_92, %c0_93] : memref<4x8x8xf32, #tpu.memory_space<vmem>>, vector<1x8x8xf32>
    %158 = vector.shape_cast %157 : vector<1x8x8xf32> to vector<8x8xf32>
    %159 = vector.broadcast %144 : vector<8x1xf32> to vector<8x8xf32>
    %160 = arith.mulf %159, %158 : vector<8x8xf32>
    %cst_94 = arith.constant dense<0.000000e+00> : vector<8x8xf32>
    %161 = tpu.matmul %147, %134, %cst_94 {dimension_numbers = #tpu.dot_dimension_numbers<[1], [0], [0], [1], [0, 0, 1, 1], [], []>} : vector<8x8xf32>, vector<8x8xf32>, vector<8x8xf32> -> vector<8x8xf32>
    %162 = arith.addf %160, %161 : vector<8x8xf32>
    %c3_95 = arith.constant 3 : index
    %c0_96 = arith.constant 0 : index
    %c0_97 = arith.constant 0 : index
    %163 = vector.load %arg11[%c3_95, %c0_96, %c0_97] : memref<4x8x8xf32, #tpu.memory_space<vmem>>, vector<1x8x8xf32>
    %164 = vector.shape_cast %163 : vector<1x8x8xf32> to vector<8x8xf32>
    %165 = vector.shape_cast %162 : vector<8x8xf32> to vector<1x8x8xf32>
    tpu.vector_store %arg11[%c3_95, %c0_96, %c0_97], %165 {strides = array<i32>} : memref<4x8x8xf32, #tpu.memory_space<vmem>>, vector<1x8x8xf32>,
    %c3_98 = arith.constant 3 : index
    %c0_99 = arith.constant 0 : index
    %c0_100 = arith.constant 0 : index
    %166 = vector.load %arg9[%c3_98, %c0_99, %c0_100] : memref<4x8x1xf32, #tpu.memory_space<vmem>>, vector<1x8x1xf32>
    %167 = vector.shape_cast %166 : vector<1x8x1xf32> to vector<8x1xf32>
    %168 = vector.shape_cast %142 : vector<8x1xf32> to vector<1x8x1xf32>
    tpu.vector_store %arg9[%c3_98, %c0_99, %c0_100], %168 {strides = array<i32>} : memref<4x8x1xf32, #tpu.memory_space<vmem>>, vector<1x8x1xf32>,
    %c0_i32_101 = arith.constant 0 : i32
    %169 = arith.cmpi eq, %arg3, %c0_i32_101 : i32
    %170 = arith.extui %169 : i1 to i32
    %c0_i32_102 = arith.constant 0 : i32
    %171 = arith.cmpi ne, %170, %c0_i32_102 : i32
    scf.if %171 {
      %c0_103 = arith.constant 0 : index
      %c0_104 = arith.constant 0 : index
      %c0_105 = arith.constant 0 : index
      %172 = vector.load %arg10[%c0_103, %c0_104, %c0_105] : memref<4x8x1xf32, #tpu.memory_space<vmem>>, vector<1x8x1xf32>
      %173 = vector.shape_cast %172 : vector<1x8x1xf32> to vector<8x1xf32>
      %174 = tpu.reciprocal %173 {approx = true} : vector<8x1xf32> -> vector<8x1xf32>
      %c0_106 = arith.constant 0 : index
      %c0_107 = arith.constant 0 : index
      %c0_108 = arith.constant 0 : index
      %175 = vector.load %arg11[%c0_106, %c0_107, %c0_108] : memref<4x8x8xf32, #tpu.memory_space<vmem>>, vector<1x8x8xf32>
      %176 = vector.shape_cast %175 : vector<1x8x8xf32> to vector<8x8xf32>
      %177 = vector.broadcast %174 : vector<8x1xf32> to vector<8x8xf32>
      %178 = arith.mulf %176, %177 : vector<8x8xf32>
      %c1_109 = arith.constant 1 : index
      %c0_110 = arith.constant 0 : index
      %c0_111 = arith.constant 0 : index
      %179 = vector.load %arg10[%c1_109, %c0_110, %c0_111] : memref<4x8x1xf32, #tpu.memory_space<vmem>>, vector<1x8x1xf32>
      %180 = vector.shape_cast %179 : vector<1x8x1xf32> to vector<8x1xf32>
      %181 = tpu.reciprocal %180 {approx = true} : vector<8x1xf32> -> vector<8x1xf32>
      %c1_112 = arith.constant 1 : index
      %c0_113 = arith.constant 0 : index
      %c0_114 = arith.constant 0 : index
      %182 = vector.load %arg11[%c1_112, %c0_113, %c0_114] : memref<4x8x8xf32, #tpu.memory_space<vmem>>, vector<1x8x8xf32>
      %183 = vector.shape_cast %182 : vector<1x8x8xf32> to vector<8x8xf32>
      %184 = vector.broadcast %181 : vector<8x1xf32> to vector<8x8xf32>
      %185 = arith.mulf %183, %184 : vector<8x8xf32>
      %c2_115 = arith.constant 2 : index
      %c0_116 = arith.constant 0 : index
      %c0_117 = arith.constant 0 : index
      %186 = vector.load %arg10[%c2_115, %c0_116, %c0_117] : memref<4x8x1xf32, #tpu.memory_space<vmem>>, vector<1x8x1xf32>
      %187 = vector.shape_cast %186 : vector<1x8x1xf32> to vector<8x1xf32>
      %188 = tpu.reciprocal %187 {approx = true} : vector<8x1xf32> -> vector<8x1xf32>
      %c2_118 = arith.constant 2 : index
      %c0_119 = arith.constant 0 : index
      %c0_120 = arith.constant 0 : index
      %189 = vector.load %arg11[%c2_118, %c0_119, %c0_120] : memref<4x8x8xf32, #tpu.memory_space<vmem>>, vector<1x8x8xf32>
      %190 = vector.shape_cast %189 : vector<1x8x8xf32> to vector<8x8xf32>
      %191 = vector.broadcast %188 : vector<8x1xf32> to vector<8x8xf32>
      %192 = arith.mulf %190, %191 : vector<8x8xf32>
      %c3_121 = arith.constant 3 : index
      %c0_122 = arith.constant 0 : index
      %c0_123 = arith.constant 0 : index
      %193 = vector.load %arg10[%c3_121, %c0_122, %c0_123] : memref<4x8x1xf32, #tpu.memory_space<vmem>>, vector<1x8x1xf32>
      %194 = vector.shape_cast %193 : vector<1x8x1xf32> to vector<8x1xf32>
      %195 = tpu.reciprocal %194 {approx = true} : vector<8x1xf32> -> vector<8x1xf32>
      %c3_124 = arith.constant 3 : index
      %c0_125 = arith.constant 0 : index
      %c0_126 = arith.constant 0 : index
      %196 = vector.load %arg11[%c3_124, %c0_125, %c0_126] : memref<4x8x8xf32, #tpu.memory_space<vmem>>, vector<1x8x8xf32>
      %197 = vector.shape_cast %196 : vector<1x8x8xf32> to vector<8x8xf32>
      %198 = vector.broadcast %195 : vector<8x1xf32> to vector<8x8xf32>
      %199 = arith.mulf %197, %198 : vector<8x8xf32>
      %200 = tpu.concatenate %178, %185, %192, %199 in 1 : vector<8x8xf32>, vector<8x8xf32>, vector<8x8xf32>, vector<8x8xf32> -> vector<8x32xf32>
      %c0_127 = arith.constant 0 : index
      %c0_128 = arith.constant 0 : index
      %c0_129 = arith.constant 0 : index
      %201 = vector.load %arg8[%c0_127, %c0_128, %c0_129] : memref<1x8x32xf32, #tpu.memory_space<vmem>>, vector<1x8x32xf32>
      %202 = vector.shape_cast %201 : vector<1x8x32xf32> to vector<8x32xf32>
      %203 = vector.shape_cast %200 : vector<8x32xf32> to vector<1x8x32xf32>
      tpu.vector_store %arg8[%c0_127, %c0_128, %c0_129], %203 {strides = array<i32>} : memref<1x8x32xf32, #tpu.memory_space<vmem>>, vector<1x8x32xf32>,
    } else {
    }
    return
  }
  func.func @transform_0(%arg0: i32, %arg1: i32, %arg2: i32, %arg3: i32) -> (i32, i32, i32) {
    %c0_i32 = arith.constant 0 : i32
    return %arg0, %arg2, %arg1 : i32, i32, i32
  }
  func.func @transform_1(%arg0: i32, %arg1: i32, %arg2: i32, %arg3: i32) -> (i32, i32, i32) {
    %c0_i32 = arith.constant 0 : i32
    return %arg0, %arg3, %arg1 : i32, i32, i32
  }
  func.func @transform_2(%arg0: i32, %arg1: i32, %arg2: i32, %arg3: i32) -> (i32, i32, i32) {
    %c0_i32 = arith.constant 0 : i32
    return %arg0, %arg3, %arg1 : i32, i32, i32
  }
  func.func @transform_3(%arg0: i32, %arg1: i32, %arg2: i32, %arg3: i32) -> (i32, i32, i32) {
    %c0_i32 = arith.constant 0 : i32
    %c0_i32_0 = arith.constant 0 : i32
    return %arg0, %c0_i32, %arg3 : i32, i32, i32
  }
  func.func @transform_4(%arg0: i32, %arg1: i32, %arg2: i32, %arg3: i32) -> (i32, i32, i32) {
    %c0_i32 = arith.constant 0 : i32
    return %arg0, %arg2, %arg1 : i32, i32, i32
  }
}

</mosaic_0001>

<llo_original>
// kernel: multi_head_attention.5
$region0: #{multi_head_attention.5}
  #allocation0 [shape = 'u32[]', space=smem, size = 0x4, offset = 0x4, fixed_abs, tag = 'smem constant byte address 0x4 - core index']
  #allocation1 [shape = 'u32[144,128]{1,0:T(1,128)}', space=vmem, size = 0x12000, scoped, tag = 'internal scratch']
  %s0 = inlined_call_operand.hbm [shape: f32[16,32], index: 0, kind: input, shape index: {}]
  %s1 = inlined_call_operand.hbm [shape: f32[32,32], index: 1, kind: input, shape index: {}]
  %s2 = inlined_call_operand.hbm [shape: f32[1,32], index: 2, kind: input, shape index: {}]
  %s3 = inlined_call_operand.hbm [shape: f32[16,32], index: 3, kind: output, shape index: {}]
  %s4 = sld [smem:[#allocation0]]
  $region34: #{multi_head_attention.5} parent=0
    _
  %s6 = ssub.s32 1, %s4
  %s7 = scalar_select 0, %s6, %s4
  $region1: #{multi_head_attention.5} parent=0
    #allocation2 [shape = 'u8[8192]{0}', space=vmem, size = 0x2000, scoped, tag = 'input window, operand 0, single buffered']
    #allocation3 [shape = 's32[1]{0}', space=sflag, size = 0x4, scoped, tag = 'scoped memory for multi_head_attention.5']
    #allocation4 [shape = 's32[1]{0}', space=sflag, size = 0x4, scoped, tag = 'scoped memory for multi_head_attention.5']
    #allocation5 [shape = 'u8[16384]{0}', space=vmem, size = 0x4000, scoped, tag = 'input window, operand 1, single buffered']
    #allocation6 [shape = 's32[1]{0}', space=sflag, size = 0x4, scoped, tag = 'scoped memory for multi_head_attention.5']
    #allocation7 [shape = 'u8[512]{0}', space=vmem, size = 0x400, scoped, tag = 'input window, operand 2, single buffered']
    #allocation8 [shape = 'u8[8192]{0}', space=vmem, size = 0x2000, scoped, tag = 'output window, operand 0, single buffered']
    %8 = vsyncpa [#allocation3], 0
    %9 = vsyncpa [#allocation6], 0
    %10 = vsyncpa [#allocation4], 0
    // Predicated region
    $region2: #{multi_head_attention.5} parent=1 // pred_check
      _
    $region3: #{multi_head_attention.5} parent=1 // pred_check_branch
      %12 = sbr.rel (0) target = $region5
    $region4: #{multi_head_attention.5} parent=1 // pred_region
      %s14 = ssub.s32 256, 256
      %15 = vsyncadd [#allocation3], %s14
      %s16 = sshll.u32 [#allocation2], 4
      %s17 = int_to_ptr.vmem [resolvable:$true] %s16
      %22 = dma.hbm_to_vmem [thread:$0]  %s0, 256, %s17, [#allocation3], 128, 128, 8
    $region5: #{multi_head_attention.5} parent=1 // pred_fallthru
      _
    // Predicated region
    $region6: #{multi_head_attention.5} parent=1 // pred_check
      _
    $region7: #{multi_head_attention.5} parent=1 // pred_check_branch
      %24 = sbr.rel (0) target = $region9
    $region8: #{multi_head_attention.5} parent=1 // pred_region
      %s26 = ssub.s32 512, 512
      %27 = vsyncadd [#allocation6], %s26
      %s28 = sshll.u32 [#allocation5], 4
      %s29 = int_to_ptr.vmem [resolvable:$true] %s28
      %34 = dma.hbm_to_vmem [thread:$0]  %s1, 512, %s29, [#allocation6], 128, 128, 8
    $region9: #{multi_head_attention.5} parent=1 // pred_fallthru
      _
    // Predicated region
    $region10: #{multi_head_attention.5} parent=1 // pred_check
      _
    $region11: #{multi_head_attention.5} parent=1 // pred_check_branch
      %36 = sbr.rel (0) target = $region13
    $region12: #{multi_head_attention.5} parent=1 // pred_region
      %s38 = ssub.s32 16, 16
      %39 = vsyncadd [#allocation6], %s38
      %s41 = sshll.u32 [#allocation7], 4
      %s42 = int_to_ptr.vmem [resolvable:$true] %s41
      %44 = dma.hbm_to_vmem [thread:$0]  %s2, 16, %s42, [#allocation6]
    $region13: #{multi_head_attention.5} parent=1 // pred_fallthru
      _
    // Predicated region
    $region14: #{multi_head_attention.5} parent=1 // pred_check
      _
    $region15: #{multi_head_attention.5} parent=1 // pred_check_branch
      %46 = sbr.rel (0) target = $region17
    $region16: #{multi_head_attention.5} parent=1 // pred_region
      %47 = dma.done [#allocation3], 256
    $region17: #{multi_head_attention.5} parent=1 // pred_fallthru
      _
    // Predicated region
    $region18: #{multi_head_attention.5} parent=1 // pred_check
      _
    $region19: #{multi_head_attention.5} parent=1 // pred_check_branch
      %49 = sbr.rel (0) target = $region21
    $region20: #{multi_head_attention.5} parent=1 // pred_region
      %50 = dma.done [#allocation6], 512
    $region21: #{multi_head_attention.5} parent=1 // pred_fallthru
      _
    // Predicated region
    $region22: #{multi_head_attention.5} parent=1 // pred_check
      _
    $region23: #{multi_head_attention.5} parent=1 // pred_check_branch
      %52 = sbr.rel (0) target = $region25
    $region24: #{multi_head_attention.5} parent=1 // pred_region
      %53 = dma.done [#allocation6], 16
    $region25: #{multi_head_attention.5} parent=1 // pred_fallthru
      _
    %v54 = vld [vmem:[#allocation2] sm:$0xff]
    %v55 = vld [vmem:[#allocation2 + $0x8] sm:$0xff]
    %v56 = vld [vmem:[#allocation5] sm:$0xff]
    %v57 = vld [vmem:[#allocation5 + $0x8] sm:$0xff]
    %v58 = vld [vmem:[#allocation5 + $0x10] sm:$0xff]
    %v59 = vld [vmem:[#allocation5 + $0x18] sm:$0xff]
    %v60 = vld [vmem:[#allocation7] sm:$0x1]
    %v62 = vlaneseq
    %v63 = vshrl.u32 %v62, 7
    %v64 = vsub.s32 0, %v63
    %v65 = vrot.slane %v60, %v64
    %vm67 = vcmask 261120
    %v69 = vsel %vm67, %v54, 0
    %v72 = vsel %vm67, %v55, 0
    %74 = vmatprep.subr.mxu0 0.0
    %75 = vmatpush1.msra.mxu0 %v56
    %76 = vmatprep.subr.mxu0 0.0
    %77 = vmatpush1.msra.mxu0 %v57
    %78 = vmatprep.subr.mxu0 0.0
    %79 = vmatpush1.msra.mxu0 %v58
    %80 = vmatprep.subr.mxu0 0.0
    %81 = vmatpush1.msra.mxu0 %v59
    %82 = vmatprep.subr.mxu0 0.0
    %83 = vmatpush1.msra.mxu0 0.0
    %84 = vmatprep.subr.mxu0 0.0
    %85 = vmatpush1.msra.mxu0 0.0
    %86 = vmatprep.subr.mxu0 0.0
    %87 = vmatpush1.msra.mxu0 0.0
    %88 = vmatprep.subr.mxu0 0.0
    %89 = vmatpush1.msra.mxu0 0.0
    %90 = vmatprep.subr.mxu0 0.0
    %91 = vmatpush1.msra.mxu0 0.0
    %92 = vmatprep.subr.mxu0 0.0
    %93 = vmatpush1.msra.mxu0 0.0
    %94 = vmatprep.subr.mxu0 0.0
    %95 = vmatpush1.msra.mxu0 0.0
    %96 = vmatprep.subr.mxu0 0.0
    %97 = vmatpush1.msra.mxu0 0.0
    %98 = vmatprep.subr.mxu0 0.0
    %99 = vmatpush1.msra.mxu0 0.0
    %100 = vmatprep.subr.mxu0 0.0
    %101 = vmatpush1.msra.mxu0 0.0
    %102 = vmatprep.subr.mxu0 0.0
    %103 = vmatpush1.msra.mxu0 0.0
    %104 = vmatprep.subr.mxu0 0.0
    %105 = vmatpush1.msra.mxu0 0.0
    %106 = vmatprep.subr.mxu0 0.0
    %107 = vmatpush1.msra.mxu0 0.0
    %108 = vmatprep.subr.mxu0 0.0
    %109 = vmatpush1.msra.mxu0 0.0
    %110 = vmatprep.subr.mxu0 0.0
    %111 = vmatpush1.msra.mxu0 0.0
    %112 = vmatprep.subr.mxu0 0.0
    %113 = vmatpush1.msra.mxu0 0.0
    %114 = vmatprep.subr.mxu0 0.0
    %115 = vmatpush1.msra.mxu0 0.0
    %116 = vmatprep.subr.mxu0 0.0
    %117 = vmatpush1.msra.mxu0 0.0
    %118 = vmatprep.subr.mxu0 0.0
    %119 = vmatpush1.msra.mxu0 0.0
    %120 = vmatprep.subr.mxu0 0.0
    %121 = vmatpush1.msra.mxu0 0.0
    %122 = vmatprep.subr.mxu0 0.0
    %123 = vmatpush1.msra.mxu0 0.0
    %124 = vmatprep.subr.mxu0 0.0
    %125 = vmatpush1.msra.mxu0 0.0
    %126 = vmatprep.subr.mxu0 0.0
    %127 = vmatpush1.msra.mxu0 0.0
    %128 = vmatprep.subr.mxu0 0.0
    %129 = vmatpush1.msra.mxu0 0.0
    %130 = vmatprep.subr.mxu0 0.0
    %131 = vmatpush1.msra.mxu0 0.0
    %132 = vmatprep.subr.mxu0 0.0
    %133 = vmatpush1.msra.mxu0 0.0
    %134 = vmatprep.subr.mxu0 0.0
    %135 = vmatpush1.msra.mxu0 0.0
    %136 = vmatprep.subr.mxu0 0.0
    %137 = vmatpush1.msra.mxu0 0.0
    %138 = vmatprep.mubr.f32.mxu0 0.0
    %139 = vmatmul.mubr.f32.gmra.mrb[0].mxu0 %v69
    %v140 = vpop.f32.mrb[0].mxu0
    %v141 = vadd.f32 %v65, %v140
    %v142 = vpop.f32.mrb[0].mxu0
    %143 = vmatprep.mubr.f32.mxu0 0.0
    %144 = vmatmul.mubr.f32.gmra.mrb[0].mxu0 %v72
    %v145 = vpop.f32.mrb[0].mxu0
    %v146 = vadd.f32 %v65, %v145
    %v147 = vpop.f32.mrb[0].mxu0
    %148 = vdwg.mxu0
    %149 = vst.msk [vmem:[#allocation8] sm:$0xff] %vm67, %v141
    %150 = vst.msk [vmem:[#allocation8 + $0x8] sm:$0xff] %vm67, %v146
    // Predicated region
    $region26: #{multi_head_attention.5} parent=1 // pred_check
      _
    $region27: #{multi_head_attention.5} parent=1 // pred_check_branch
      %152 = sbr.rel (0) target = $region29
    $region28: #{multi_head_attention.5} parent=1 // pred_region
      %s154 = ssub.s32 256, 256
      %155 = vsyncadd [#allocation4], %s154
      %s156 = sshll.u32 [#allocation8], 4
      %s157 = int_to_ptr.vmem [resolvable:$true] %s156
      %162 = dma.vmem_to_hbm [thread:$0]  %s157, 256, %s3, [#allocation4], 128, 128, 8
    $region29: #{multi_head_attention.5} parent=1 // pred_fallthru
      _
    // Predicated region
    $region30: #{multi_head_attention.5} parent=1 // pred_check
      _
    $region31: #{multi_head_attention.5} parent=1 // pred_check_branch
      %164 = sbr.rel (0) target = $region33
    $region32: #{multi_head_attention.5} parent=1 // pred_region
      %165 = dma.done [#allocation4], 256
    $region33: #{multi_head_attention.5} parent=1 // pred_fallthru
      _
    %166 = vsyncpa [#allocation3], 1
    %167 = vsyncpa [#allocation6], 1
    %168 = vsyncpa [#allocation4], 1

// kernel: multi_head_attention.8
$region0: #{multi_head_attention.8}
  #allocation0 [shape = 'u32[]', space=smem, size = 0x4, offset = 0x4, fixed_abs, tag = 'smem constant byte address 0x4 - core index']
  #allocation1 [shape = 'u32[144,128]{1,0:T(1,128)}', space=vmem, size = 0x12000, scoped, tag = 'internal scratch']
  #allocation2 [shape = 'f32[4,8,1]{2,1,0:T(8,128)}', space=vmem, size = 0x4000, scoped, tag = 'scratch operand']
  #allocation3 [shape = 'f32[4,8,1]{2,1,0:T(8,128)}', space=vmem, size = 0x4000, scoped, tag = 'scratch operand']
  #allocation4 [shape = 'f32[4,8,8]{2,1,0:T(8,128)}', space=vmem, size = 0x4000, scoped, tag = 'scratch operand']
  %s0 = inlined_call_operand.hbm [shape: f32[2,8,32], index: 0, kind: input, shape index: {}]
  %s1 = inlined_call_operand.hbm [shape: f32[2,8,32], index: 1, kind: input, shape index: {}]
  %s2 = inlined_call_operand.hbm [shape: f32[2,8,32], index: 2, kind: input, shape index: {}]
  %s3 = inlined_call_operand.hbm [shape: f32[2,1,8], index: 3, kind: input, shape index: {}]
  %s4 = inlined_call_operand.hbm [shape: f32[2,8,32], index: 4, kind: output, shape index: {}]
  %s5 = sld [smem:[#allocation0]]
  $region73: #{multi_head_attention.8} parent=0
    _
  %s7 = ssub.s32 1, %s5
  %s8 = scalar_select 0, %s7, %s5
  $region1: #{multi_head_attention.8} parent=0
    #allocation5 [shape = 'u8[8192]{0}', space=vmem, size = 0x2000, scoped, tag = 'input window, operand 0']
    #allocation6 [shape = 's32[2]{0}', space=sflag, size = 0x8, scoped, tag = 'scoped memory for multi_head_attention.8']
    #allocation7 [shape = 's32[2]{0}', space=sflag, size = 0x8, scoped, tag = 'scoped memory for multi_head_attention.8']
    #allocation8 [shape = 'u8[8192]{0}', space=vmem, size = 0x2000, scoped, tag = 'input window, operand 1']
    #allocation9 [shape = 's32[2]{0}', space=sflag, size = 0x8, scoped, tag = 'scoped memory for multi_head_attention.8']
    #allocation10 [shape = 'u8[8192]{0}', space=vmem, size = 0x2000, scoped, tag = 'input window, operand 2']
    #allocation11 [shape = 'u8[1024]{0}', space=vmem, size = 0x400, scoped, tag = 'input window, operand 3']
    #allocation12 [shape = 's32[2]{0}', space=sflag, size = 0x8, scoped, tag = 'scoped memory for multi_head_attention.8']
    #allocation13 [shape = 'u8[8192]{0}', space=vmem, size = 0x2000, scoped, tag = 'output window, operand 0']
    %9 = vsyncpa [#allocation6], 0
    %s10 = scalar_lea.sflag [#allocation6], 1
    %11 = vsyncpa %s10, 0
    %12 = vsyncpa [#allocation9], 0
    %s13 = scalar_lea.sflag [#allocation9], 1
    %14 = vsyncpa %s13, 0
    %15 = vsyncpa [#allocation12], 0
    %s16 = scalar_lea.sflag [#allocation12], 1
    %17 = vsyncpa %s16, 0
    %18 = vsyncpa [#allocation7], 0
    %s19 = scalar_lea.sflag [#allocation7], 1
    %20 = vsyncpa %s19, 0
    loop: start=0, step=1, limit=4
    $region2: #{multi_head_attention.8} parent=1 // loop_pre_header
      _
    $region3: #{multi_head_attention.8} parent=1 // loop_header
      %s22 = sphi 0, %s26
      %p23 = scmp.ge.s32.totalorder %s22, 4
      %s29 = sphi 0, %s55
      %s30 = sphi 0, %s51
      %s31 = sphi 0, %s47
      %s32 = sphi 0, %s43
      %s33 = sphi 0, %s29
      %s34 = sphi 0, %s30
      %s35 = sphi 0, %s31
      %s36 = sphi 0, %s32
      %s37 = sphi 0, %s33
      %s38 = sphi 0, %s34
      %s39 = sphi 0, %s35
      %s40 = sphi 0, %s36
      %s62 = sphi 0, %s64
      %s65 = sphi 0, %s62
      %s66 = sphi 0, %s65
      %s82 = sphi 0, %s66
      %s92 = sphi 0, %s94
      %s95 = sphi 0, %s92
      %s96 = sphi 0, %s95
      %s112 = sphi 0, %s96
      %s122 = sphi 0, %s124
      %s125 = sphi 0, %s122
      %s126 = sphi 0, %s125
      %s142 = sphi 0, %s126
      %s150 = sphi 0, %s152
      %s153 = sphi 0, %s150
      %s154 = sphi 0, %s153
      %s170 = sphi 0, %s154
      %s180 = sphi 0, %s182
      %s183 = sphi 0, %s180
      %s184 = sphi 0, %s183
      %s200 = sphi 0, %s184
    $region4: #{multi_head_attention.8} parent=1 // loop_header_branch
      %25 = sbr.rel (%p23) target = $region8
    $region5: #{multi_head_attention.8} parent=1 // loop_body
      %s27 = ssub.s32 %s22, 1
      %s28 = ssub.s32 %s22, 2
      %s41 = sadd.s32 1, %s32
      %p42 = scmp.ge.s32.totalorder %s41, 1
      %s43 = scalar_select %p42, 0, %s41
      %s44 = sadd.s32 1, %s31
      %s45 = scalar_select %p42, %s44, %s31
      %p46 = scmp.ge.s32.totalorder %s45, 1
      %s47 = scalar_select %p46, 0, %s45
      %s48 = sadd.s32 1, %s30
      %s49 = scalar_select %p46, %s48, %s30
      %p50 = scmp.ge.s32.totalorder %s49, 1
      %s51 = scalar_select %p50, 0, %s49
      %s52 = sadd.s32 1, %s29
      %s53 = scalar_select %p50, %s52, %s29
      %p54 = scmp.ge.s32.totalorder %s53, 2
      %s55 = scalar_select %p54, 0, %s53
      %s56 = ssub.s32 %s29, %s55
      %s57 = ssub.s32 %s31, %s47
      %s58 = sor.u32 %s56, %s57
      %s59 = ssub.s32 %s30, %s51
      %s60 = sor.u32 %s58, %s59
      %p61 = scmp.eq.s32.totalorder %s60, 0
      %s63 = sadd.s32 %s62, 1
      %s64 = scalar_select %p61, %s62, %s63
      %p67 = pneg %p61
      %p68 = scmp.eq.s32.totalorder %s22, 1
      %p69 = por %p67, %p68
      %p70 = scmp.ne.s32.totalorder %s62, %s65
      %p71 = scmp.eq.s32.totalorder %s22, 0
      %p72 = por %p70, %p71
      %p73 = scmp.ne.s32.totalorder %s62, %s65
      %p74 = scmp.eq.s32.totalorder %s27, 1
      %p75 = por %p73, %p74
      %p76 = scmp.ne.s32.totalorder %s65, %s66
      %p77 = scmp.eq.s32.totalorder %s27, 0
      %p78 = por %p76, %p77
      %p79 = scmp.ne.s32.totalorder %s65, %s66
      %p80 = scmp.eq.s32.totalorder %s28, 1
      %p81 = por %p79, %p80
      %p83 = scmp.ne.s32.totalorder %s66, %s82
      %p84 = scmp.eq.s32.totalorder %s28, 0
      %p85 = por %p83, %p84
      %s86 = ssub.s32 %s29, %s55
      %s87 = ssub.s32 %s32, %s43
      %s88 = sor.u32 %s86, %s87
      %s89 = ssub.s32 %s30, %s51
      %s90 = sor.u32 %s88, %s89
      %p91 = scmp.eq.s32.totalorder %s90, 0
      %s93 = sadd.s32 %s92, 1
      %s94 = scalar_select %p91, %s92, %s93
      %p97 = pneg %p91
      %p98 = scmp.eq.s32.totalorder %s22, 1
      %p99 = por %p97, %p98
      %p100 = scmp.ne.s32.totalorder %s92, %s95
      %p101 = scmp.eq.s32.totalorder %s22, 0
      %p102 = por %p100, %p101
      %p103 = scmp.ne.s32.totalorder %s92, %s95
      %p104 = scmp.eq.s32.totalorder %s27, 1
      %p105 = por %p103, %p104
      %p106 = scmp.ne.s32.totalorder %s95, %s96
      %p107 = scmp.eq.s32.totalorder %s27, 0
      %p108 = por %p106, %p107
      %p109 = scmp.ne.s32.totalorder %s95, %s96
      %p110 = scmp.eq.s32.totalorder %s28, 1
      %p111 = por %p109, %p110
      %p113 = scmp.ne.s32.totalorder %s96, %s112
      %p114 = scmp.eq.s32.totalorder %s28, 0
      %p115 = por %p113, %p114
      %s116 = ssub.s32 %s29, %s55
      %s117 = ssub.s32 %s32, %s43
      %s118 = sor.u32 %s116, %s117
      %s119 = ssub.s32 %s30, %s51
      %s120 = sor.u32 %s118, %s119
      %p121 = scmp.eq.s32.totalorder %s120, 0
      %s123 = sadd.s32 %s122, 1
      %s124 = scalar_select %p121, %s122, %s123
      %p127 = pneg %p121
      %p128 = scmp.eq.s32.totalorder %s22, 1
      %p129 = por %p127, %p128
      %p130 = scmp.ne.s32.totalorder %s122, %s125
      %p131 = scmp.eq.s32.totalorder %s22, 0
      %p132 = por %p130, %p131
      %p133 = scmp.ne.s32.totalorder %s122, %s125
      %p134 = scmp.eq.s32.totalorder %s27, 1
      %p135 = por %p133, %p134
      %p136 = scmp.ne.s32.totalorder %s125, %s126
      %p137 = scmp.eq.s32.totalorder %s27, 0
      %p138 = por %p136, %p137
      %p139 = scmp.ne.s32.totalorder %s125, %s126
      %p140 = scmp.eq.s32.totalorder %s28, 1
      %p141 = por %p139, %p140
      %p143 = scmp.ne.s32.totalorder %s126, %s142
      %p144 = scmp.eq.s32.totalorder %s28, 0
      %p145 = por %p143, %p144
      %s146 = ssub.s32 %s29, %s55
      %s147 = ssub.s32 %s32, %s43
      %s148 = sor.u32 %s146, %s147
      %p149 = scmp.eq.s32.totalorder %s148, 0
      %s151 = sadd.s32 %s150, 1
      %s152 = scalar_select %p149, %s150, %s151
      %p155 = pneg %p149
      %p156 = scmp.eq.s32.totalorder %s22, 1
      %p157 = por %p155, %p156
      %p158 = scmp.ne.s32.totalorder %s150, %s153
      %p159 = scmp.eq.s32.totalorder %s22, 0
      %p160 = por %p158, %p159
      %p161 = scmp.ne.s32.totalorder %s150, %s153
      %p162 = scmp.eq.s32.totalorder %s27, 1
      %p163 = por %p161, %p162
      %p164 = scmp.ne.s32.totalorder %s153, %s154
      %p165 = scmp.eq.s32.totalorder %s27, 0
      %p166 = por %p164, %p165
      %p167 = scmp.ne.s32.totalorder %s153, %s154
      %p168 = scmp.eq.s32.totalorder %s28, 1
      %p169 = por %p167, %p168
      %p171 = scmp.ne.s32.totalorder %s154, %s170
      %p172 = scmp.eq.s32.totalorder %s28, 0
      %p173 = por %p171, %p172
      %s174 = ssub.s32 %s29, %s55
      %s175 = ssub.s32 %s31, %s47
      %s176 = sor.u32 %s174, %s175
      %s177 = ssub.s32 %s30, %s51
      %s178 = sor.u32 %s176, %s177
      %p179 = scmp.eq.s32.totalorder %s178, 0
      %s181 = sadd.s32 %s180, 1
      %s182 = scalar_select %p179, %s180, %s181
      %p185 = pneg %p179
      %p186 = scmp.eq.s32.totalorder %s22, 1
      %p187 = por %p185, %p186
      %p188 = scmp.ne.s32.totalorder %s180, %s183
      %p189 = scmp.eq.s32.totalorder %s22, 0
      %p190 = por %p188, %p189
      %p191 = scmp.ne.s32.totalorder %s180, %s183
      %p192 = scmp.eq.s32.totalorder %s27, 1
      %p193 = por %p191, %p192
      %p194 = scmp.ne.s32.totalorder %s183, %s184
      %p195 = scmp.eq.s32.totalorder %s27, 0
      %p196 = por %p194, %p195
      %p197 = scmp.ne.s32.totalorder %s183, %s184
      %p198 = scmp.eq.s32.totalorder %s28, 1
      %p199 = por %p197, %p198
      %p201 = scmp.ne.s32.totalorder %s184, %s200
      %p202 = scmp.eq.s32.totalorder %s28, 0
      %p203 = por %p201, %p202
      %p204 = scmp.le.s32.totalorder 1, %s22
      %p205 = scmp.lt.s32.totalorder %s22, 3
      %p206 = pnand %p204, %p205
      %p207 = pneg %p206
      // Predicated region
      $region9: #{multi_head_attention.8} parent=5 // pred_check
        _
      $region10: #{multi_head_attention.8} parent=5 // pred_check_branch
        %209 = sbr.rel (%p206) target = $region12
      $region11: #{multi_head_attention.8} parent=5 // pred_region
        %s210 = ssub.s32 %s22, 1
      $region12: #{multi_head_attention.8} parent=5 // pred_fallthru
        _
      %p211 = scmp.lt.s32.totalorder %s22, 2
      // Predicated region
      $region13: #{multi_head_attention.8} parent=5 // pred_check
        %p212 = pneg %p211
      $region14: #{multi_head_attention.8} parent=5 // pred_check_branch
        %214 = sbr.rel (%p212) target = $region16
      $region15: #{multi_head_attention.8} parent=5 // pred_region
        // Predicated region
        $region17: #{multi_head_attention.8} parent=15 // pred_check
          %p215 = pneg %p72
        $region18: #{multi_head_attention.8} parent=15 // pred_check_branch
          %217 = sbr.rel (%p215) target = $region20
        $region19: #{multi_head_attention.8} parent=15 // pred_region
          %s218 = sand.u32 %s62, 1
          %s219 = scalar_lea.sflag [#allocation6], %s218
          %s220 = sand.u32 %s62, 1
          %s221 = smul.addr %s220, 8
          %s222 = scalar_lea.vmem [#allocation5], %s221
          %s224 = ssub.s32 128, 128
          %225 = vsyncadd %s219, %s224
          %s226 = sadd.s32 %s30, %s31
          %s227 = sadd.s32 %s226, %s29
          %s228 = smul.addr %s227, 128
          %s229 = scalar_lea.hbm %s0, %s228
          %s231 = sshll.u32 %s222, 4
          %s232 = int_to_ptr.vmem [resolvable:$true] %s231
          %234 = dma.hbm_to_vmem [thread:$0]  %s229, 128, %s232, %s219
        $region20: #{multi_head_attention.8} parent=15 // pred_fallthru
          _
        // Predicated region
        $region21: #{multi_head_attention.8} parent=15 // pred_check
          %p235 = pneg %p102
        $region22: #{multi_head_attention.8} parent=15 // pred_check_branch
          %237 = sbr.rel (%p235) target = $region24
        $region23: #{multi_head_attention.8} parent=15 // pred_region
          %s238 = sand.u32 %s22, 1
          %s239 = scalar_lea.sflag [#allocation9], %s238
          %s240 = sand.u32 %s92, 1
          %s241 = smul.addr %s240, 8
          %s242 = scalar_lea.vmem [#allocation8], %s241
          %s244 = ssub.s32 128, 128
          %245 = vsyncadd %s239, %s244
          %s246 = sadd.s32 %s30, %s32
          %s247 = sadd.s32 %s246, %s29
          %s248 = smul.addr %s247, 128
          %s249 = scalar_lea.hbm %s1, %s248
          %s251 = sshll.u32 %s242, 4
          %s252 = int_to_ptr.vmem [resolvable:$true] %s251
          %254 = dma.hbm_to_vmem [thread:$0]  %s249, 128, %s252, %s239
        $region24: #{multi_head_attention.8} parent=15 // pred_fallthru
          _
        // Predicated region
        $region25: #{multi_head_attention.8} parent=15 // pred_check
          %p255 = pneg %p132
        $region26: #{multi_head_attention.8} parent=15 // pred_check_branch
          %257 = sbr.rel (%p255) target = $region28
        $region27: #{multi_head_attention.8} parent=15 // pred_region
          %s258 = sand.u32 %s22, 1
          %s259 = scalar_lea.sflag [#allocation9], %s258
          %s260 = sand.u32 %s122, 1
          %s261 = smul.addr %s260, 8
          %s262 = scalar_lea.vmem [#allocation10], %s261
          %s264 = ssub.s32 128, 128
          %265 = vsyncadd %s259, %s264
          %s266 = sadd.s32 %s30, %s32
          %s267 = sadd.s32 %s266, %s29
          %s268 = smul.addr %s267, 128
          %s269 = scalar_lea.hbm %s2, %s268
          %s271 = sshll.u32 %s262, 4
          %s272 = int_to_ptr.vmem [resolvable:$true] %s271
          %274 = dma.hbm_to_vmem [thread:$0]  %s269, 128, %s272, %s259
        $region28: #{multi_head_attention.8} parent=15 // pred_fallthru
          _
        // Predicated region
        $region29: #{multi_head_attention.8} parent=15 // pred_check
          %p275 = pneg %p160
        $region30: #{multi_head_attention.8} parent=15 // pred_check_branch
          %277 = sbr.rel (%p275) target = $region32
        $region31: #{multi_head_attention.8} parent=15 // pred_region
          %s278 = sand.u32 %s150, 1
          %s279 = scalar_lea.sflag [#allocation12], %s278
          %s280 = sand.u32 %s150, 1
          %s281 = scalar_lea.vmem [#allocation11], %s280
          %s283 = ssub.s32 16, 16
          %284 = vsyncadd %s279, %s283
          %s285 = sadd.s32 %s32, %s29
          %s286 = smul.addr %s285, 16
          %s287 = scalar_lea.hbm %s3, %s286
          %s289 = sshll.u32 %s281, 4
          %s290 = int_to_ptr.vmem [resolvable:$true] %s289
          %292 = dma.hbm_to_vmem [thread:$0]  %s287, 16, %s290, %s279
        $region32: #{multi_head_attention.8} parent=15 // pred_fallthru
          _
      $region16: #{multi_head_attention.8} parent=5 // pred_fallthru
        _
      %p293 = scmp.le.s32.totalorder 1, %s22
      %p294 = scmp.lt.s32.totalorder %s22, 3
      %p295 = pnand %p293, %p294
      %p296 = pneg %p295
      // Predicated region
      $region33: #{multi_head_attention.8} parent=5 // pred_check
        _
      $region34: #{multi_head_attention.8} parent=5 // pred_check_branch
        %298 = sbr.rel (%p295) target = $region36
      $region35: #{multi_head_attention.8} parent=5 // pred_region
        %s299 = ssub.s32 %s22, 1
        %s300 = sand.u32 %s65, 1
        %s301 = scalar_lea.sflag [#allocation6], %s300
        %s302 = sand.u32 %s65, 1
        %s303 = smul.addr %s302, 8
        %s304 = scalar_lea.vmem [#allocation5], %s303
        // Predicated region
        $region37: #{multi_head_attention.8} parent=35 // pred_check
          %p305 = pneg %p78
        $region38: #{multi_head_attention.8} parent=35 // pred_check_branch
          %307 = sbr.rel (%p305) target = $region40
        $region39: #{multi_head_attention.8} parent=35 // pred_region
          %308 = dma.done %s301, 128
        $region40: #{multi_head_attention.8} parent=35 // pred_fallthru
          _
        %s309 = sand.u32 %s27, 1
        %s310 = scalar_lea.sflag [#allocation9], %s309
        %s311 = sand.u32 %s95, 1
        %s312 = smul.addr %s311, 8
        %s313 = scalar_lea.vmem [#allocation8], %s312
        // Predicated region
        $region41: #{multi_head_attention.8} parent=35 // pred_check
          %p314 = pneg %p108
        $region42: #{multi_head_attention.8} parent=35 // pred_check_branch
          %316 = sbr.rel (%p314) target = $region44
        $region43: #{multi_head_attention.8} parent=35 // pred_region
          %317 = dma.done %s310, 128
        $region44: #{multi_head_attention.8} parent=35 // pred_fallthru
          _
        %s318 = sand.u32 %s27, 1
        %s319 = scalar_lea.sflag [#allocation9], %s318
        %s320 = sand.u32 %s125, 1
        %s321 = smul.addr %s320, 8
        %s322 = scalar_lea.vmem [#allocation10], %s321
        // Predicated region
        $region45: #{multi_head_attention.8} parent=35 // pred_check
          %p323 = pneg %p138
        $region46: #{multi_head_attention.8} parent=35 // pred_check_branch
          %325 = sbr.rel (%p323) target = $region48
        $region47: #{multi_head_attention.8} parent=35 // pred_region
          %326 = dma.done %s319, 128
        $region48: #{multi_head_attention.8} parent=35 // pred_fallthru
          _
        %s327 = sand.u32 %s153, 1
        %s328 = scalar_lea.sflag [#allocation12], %s327
        %s329 = sand.u32 %s153, 1
        %s330 = scalar_lea.vmem [#allocation11], %s329
        // Predicated region
        $region49: #{multi_head_attention.8} parent=35 // pred_check
          %p331 = pneg %p166
        $region50: #{multi_head_attention.8} parent=35 // pred_check_branch
          %333 = sbr.rel (%p331) target = $region52
        $region51: #{multi_head_attention.8} parent=35 // pred_region
          %334 = dma.done %s328, 16
        $region52: #{multi_head_attention.8} parent=35 // pred_fallthru
          _
        %s335 = sand.u32 %s65, 1
        %s336 = scalar_lea.sflag [#allocation6], %s335
        %s337 = sand.u32 %s65, 1
        %s338 = smul.addr %s337, 8
        %s339 = scalar_lea.vmem [#allocation5], %s338
        %p340 = pneg %p78
        %p341 = pneg %p75
        %s342 = sand.u32 %s27, 1
        %s343 = scalar_lea.sflag [#allocation9], %s342
        %s344 = sand.u32 %s95, 1
        %s345 = smul.addr %s344, 8
        %s346 = scalar_lea.vmem [#allocation8], %s345
        %p347 = pneg %p108
        %p348 = pneg %p105
        %s349 = sand.u32 %s27, 1
        %s350 = scalar_lea.sflag [#allocation9], %s349
        %s351 = sand.u32 %s125, 1
        %s352 = smul.addr %s351, 8
        %s353 = scalar_lea.vmem [#allocation10], %s352
        %p354 = pneg %p138
        %p355 = pneg %p135
        %s356 = sand.u32 %s153, 1
        %s357 = scalar_lea.sflag [#allocation12], %s356
        %s358 = sand.u32 %s153, 1
        %s359 = scalar_lea.vmem [#allocation11], %s358
        %p360 = pneg %p166
        %p361 = pneg %p163
        %p362 = pneg %p196
        %p363 = pneg %p193
        %s364 = sand.u32 %s183, 1
        %s365 = scalar_lea.sflag [#allocation7], %s364
        %s366 = sand.u32 %s183, 1
        %s367 = smul.addr %s366, 8
        %s368 = scalar_lea.vmem [#allocation13], %s367
        %p369 = scmp.eq.s32.totalorder %s36, 0
        // Predicated region
        $region53: #{multi_head_attention.8} parent=35 // pred_check
          %p370 = pneg %p369
        $region54: #{multi_head_attention.8} parent=35 // pred_check_branch
          %372 = sbr.rel (%p370) target = $region56
        $region55: #{multi_head_attention.8} parent=35 // pred_region
          %vm373 = vcmask 7168
          %374 = vst.msk [vmem:[#allocation2] sm:$0xff] %vm373, -inf
          %375 = vst.msk [vmem:[#allocation2 + $0x8] sm:$0xff] %vm373, -inf
          %376 = vst.msk [vmem:[#allocation2 + $0x10] sm:$0xff] %vm373, -inf
          %377 = vst.msk [vmem:[#allocation2 + $0x18] sm:$0xff] %vm373, -inf
          %378 = vst.msk [vmem:[#allocation3] sm:$0xff] %vm373, 0.0
          %379 = vst.msk [vmem:[#allocation3 + $0x8] sm:$0xff] %vm373, 0.0
          %380 = vst.msk [vmem:[#allocation3 + $0x10] sm:$0xff] %vm373, 0.0
          %381 = vst.msk [vmem:[#allocation3 + $0x18] sm:$0xff] %vm373, 0.0
          %vm382 = vcmask 64512
          %383 = vst.msk [vmem:[#allocation4] sm:$0xff] %vm382, 0.0
          %384 = vst.msk [vmem:[#allocation4 + $0x8] sm:$0xff] %vm382, 0.0
          %385 = vst.msk [vmem:[#allocation4 + $0x10] sm:$0xff] %vm382, 0.0
          %386 = vst.msk [vmem:[#allocation4 + $0x18] sm:$0xff] %vm382, 0.0
        $region56: #{multi_head_attention.8} parent=35 // pred_fallthru
          _
        %v387 = vld [vmem:[%s330] sm:$0x1]
        %v388 = vmul.f32 %v387, -1e+09
        %v389 = vld [vmem:[%s304] sm:$0xff]
        %v390 = vld [vmem:[%s313] sm:$0xff]
        %v391 = vld [vmem:[%s322] sm:$0xff]
        %v392 = vmul.f32 %v389, 0.35355338
        %v394 = vlaneseq
        %v395 = vshrl.u32 %v394, 7
        %v396 = vsub.s32 0, %v395
        %v397 = vrot.slane %v388, %v396
        %vm399 = vcmask 64512
        %v401 = vsel %vm399, %v392, 0
        %v404 = vsel %vm399, %v390, 0
        %406 = vmatprep.subr.mxu0 0.0
        %407 = vmatpush1.xpose.msra.mxu0 %v404
        %408 = vmatprep.subr.mxu0 0.0
        %409 = vmatpush1.xpose.msra.mxu0 0.0
        %410 = vmatprep.subr.mxu0 0.0
        %411 = vmatpush1.xpose.msra.mxu0 0.0
        %412 = vmatprep.subr.mxu0 0.0
        %413 = vmatpush1.xpose.msra.mxu0 0.0
        %414 = vmatprep.subr.mxu0 0.0
        %415 = vmatpush1.xpose.msra.mxu0 0.0
        %416 = vmatprep.subr.mxu0 0.0
        %417 = vmatpush1.xpose.msra.mxu0 0.0
        %418 = vmatprep.subr.mxu0 0.0
        %419 = vmatpush1.xpose.msra.mxu0 0.0
        %420 = vmatprep.subr.mxu0 0.0
        %421 = vmatpush1.xpose.msra.mxu0 0.0
        %422 = vmatprep.subr.mxu0 0.0
        %423 = vmatpush1.xpose.msra.mxu0 0.0
        %424 = vmatprep.subr.mxu0 0.0
        %425 = vmatpush1.xpose.msra.mxu0 0.0
        %426 = vmatprep.subr.mxu0 0.0
        %427 = vmatpush1.xpose.msra.mxu0 0.0
        %428 = vmatprep.subr.mxu0 0.0
        %429 = vmatpush1.xpose.msra.mxu0 0.0
        %430 = vmatprep.subr.mxu0 0.0
        %431 = vmatpush1.xpose.msra.mxu0 0.0
        %432 = vmatprep.subr.mxu0 0.0
        %433 = vmatpush1.xpose.msra.mxu0 0.0
        %434 = vmatprep.subr.mxu0 0.0
        %435 = vmatpush1.xpose.msra.mxu0 0.0
        %436 = vmatprep.subr.mxu0 0.0
        %437 = vmatpush1.xpose.msra.mxu0 0.0
        %438 = vmatprep.subr.mxu0 0.0
        %439 = vmatpush1.xpose.msra.mxu0 0.0
        %440 = vmatprep.subr.mxu0 0.0
        %441 = vmatpush1.xpose.msra.mxu0 0.0
        %442 = vmatprep.subr.mxu0 0.0
        %443 = vmatpush1.xpose.msra.mxu0 0.0
        %444 = vmatprep.subr.mxu0 0.0
        %445 = vmatpush1.xpose.msra.mxu0 0.0
        %446 = vmatprep.subr.mxu0 0.0
        %447 = vmatpush1.xpose.msra.mxu0 0.0
        %448 = vmatprep.subr.mxu0 0.0
        %449 = vmatpush1.xpose.msra.mxu0 0.0
        %450 = vmatprep.subr.mxu0 0.0
        %451 = vmatpush1.xpose.msra.mxu0 0.0
        %452 = vmatprep.subr.mxu0 0.0
        %453 = vmatpush1.xpose.msra.mxu0 0.0
        %454 = vmatprep.subr.mxu0 0.0
        %455 = vmatpush1.xpose.msra.mxu0 0.0
        %456 = vmatprep.subr.mxu0 0.0
        %457 = vmatpush1.xpose.msra.mxu0 0.0
        %458 = vmatprep.subr.mxu0 0.0
        %459 = vmatpush1.xpose.msra.mxu0 0.0
        %460 = vmatprep.subr.mxu0 0.0
        %461 = vmatpush1.xpose.msra.mxu0 0.0
        %462 = vmatprep.subr.mxu0 0.0
        %463 = vmatpush1.xpose.msra.mxu0 0.0
        %464 = vmatprep.subr.mxu0 0.0
        %465 = vmatpush1.xpose.msra.mxu0 0.0
        %466 = vmatprep.subr.mxu0 0.0
        %467 = vmatpush1.xpose.msra.mxu0 0.0
        %468 = vmatprep.subr.mxu0 0.0
        %469 = vmatpush1.xpose.msra.mxu0 0.0
        %470 = vmatprep.mubr.f32.mxu0 0.0
        %471 = vmatmul.mubr.f32.gmra.mrb[0].mxu0 %v401
        %v472 = vpop.f32.mrb[0].mxu0
        %v473 = vadd.f32 %v397, %v472
        %v474 = vpop.f32.mrb[0].mxu0
        %475 = vdwg.mxu0
        %v476 = vld [vmem:[#allocation2] sm:$0xff]
        %v477 = vsel %vm399, %v473, -inf
        %478 = vmax.xlane.f32.xlu0 %v477
        %v479 = vpop.xlane.xlu0 %478
        %v480 = vmax.f32 %v476, %v479
        %v481 = vsub.f32 %v476, %v480
        %v482 = vmul.f32 %v481, 1.442695
        %v483 = vpow.pop %v482
        %485 = vset.pattern.permute.xlu0 0
        %486 = vperm.xlu0 %485, %v480
        %v487 = vpop.permute.xlu0 %486
        %v489 = vsub.f32 %v473, %v487
        %v490 = vmul.f32 %v489, 1.442695
        %v491 = vpow.pop %v490
        %v492 = vld [vmem:[#allocation3] sm:$0xff]
        %v493 = vmul.f32 %v483, %v492
        %v494 = vsel %vm399, %v491, 0.0
        %495 = vadd.xlane.f32.xlu0 %v494
        %v496 = vpop.xlane.xlu0 %495
        %v497 = vadd.f32 %v493, %v496
        %vm498 = vcmask 7168
        %499 = vst.msk [vmem:[#allocation3] sm:$0xff] %vm498, %v497
        %v500 = vld [vmem:[#allocation4] sm:$0xff]
        %502 = vset.pattern.permute.xlu0 0
        %503 = vperm.xlu0 %502, %v483
        %v504 = vpop.permute.xlu0 %503
        %v506 = vmul.f32 %v504, %v500
        %v508 = vsel %vm399, %v491, 0
        %510 = vmatprep.subr.mxu0 0.0
        %511 = vmatpush1.msra.mxu0 %v391
        %512 = vmatprep.subr.mxu0 0.0
        %513 = vmatpush1.msra.mxu0 0.0
        %514 = vmatprep.subr.mxu0 0.0
        %515 = vmatpush1.msra.mxu0 0.0
        %516 = vmatprep.subr.mxu0 0.0
        %517 = vmatpush1.msra.mxu0 0.0
        %518 = vmatprep.subr.mxu0 0.0
        %519 = vmatpush1.msra.mxu0 0.0
        %520 = vmatprep.subr.mxu0 0.0
        %521 = vmatpush1.msra.mxu0 0.0
        %522 = vmatprep.subr.mxu0 0.0
        %523 = vmatpush1.msra.mxu0 0.0
        %524 = vmatprep.subr.mxu0 0.0
        %525 = vmatpush1.msra.mxu0 0.0
        %526 = vmatprep.subr.mxu0 0.0
        %527 = vmatpush1.msra.mxu0 0.0
        %528 = vmatprep.subr.mxu0 0.0
        %529 = vmatpush1.msra.mxu0 0.0
        %530 = vmatprep.subr.mxu0 0.0
        %531 = vmatpush1.msra.mxu0 0.0
        %532 = vmatprep.subr.mxu0 0.0
        %533 = vmatpush1.msra.mxu0 0.0
        %534 = vmatprep.subr.mxu0 0.0
        %535 = vmatpush1.msra.mxu0 0.0
        %536 = vmatprep.subr.mxu0 0.0
        %537 = vmatpush1.msra.mxu0 0.0
        %538 = vmatprep.subr.mxu0 0.0
        %539 = vmatpush1.msra.mxu0 0.0
        %540 = vmatprep.subr.mxu0 0.0
        %541 = vmatpush1.msra.mxu0 0.0
        %542 = vmatprep.subr.mxu0 0.0
        %543 = vmatpush1.msra.mxu0 0.0
        %544 = vmatprep.subr.mxu0 0.0
        %545 = vmatpush1.msra.mxu0 0.0
        %546 = vmatprep.subr.mxu0 0.0
        %547 = vmatpush1.msra.mxu0 0.0
        %548 = vmatprep.subr.mxu0 0.0
        %549 = vmatpush1.msra.mxu0 0.0
        %550 = vmatprep.subr.mxu0 0.0
        %551 = vmatpush1.msra.mxu0 0.0
        %552 = vmatprep.subr.mxu0 0.0
        %553 = vmatpush1.msra.mxu0 0.0
        %554 = vmatprep.subr.mxu0 0.0
        %555 = vmatpush1.msra.mxu0 0.0
        %556 = vmatprep.subr.mxu0 0.0
        %557 = vmatpush1.msra.mxu0 0.0
        %558 = vmatprep.subr.mxu0 0.0
        %559 = vmatpush1.msra.mxu0 0.0
        %560 = vmatprep.subr.mxu0 0.0
        %561 = vmatpush1.msra.mxu0 0.0
        %562 = vmatprep.subr.mxu0 0.0
        %563 = vmatpush1.msra.mxu0 0.0
        %564 = vmatprep.subr.mxu0 0.0
        %565 = vmatpush1.msra.mxu0 0.0
        %566 = vmatprep.subr.mxu0 0.0
        %567 = vmatpush1.msra.mxu0 0.0
        %568 = vmatprep.subr.mxu0 0.0
        %569 = vmatpush1.msra.mxu0 0.0
        %570 = vmatprep.subr.mxu0 0.0
        %571 = vmatpush1.msra.mxu0 0.0
        %572 = vmatprep.subr.mxu0 0.0
        %573 = vmatpush1.msra.mxu0 0.0
        %574 = vmatprep.mubr.f32.mxu0 0.0
        %575 = vmatmul.mubr.f32.gmra.mrb[0].mxu0 %v508
        %v576 = vpop.f32.mrb[0].mxu0
        %v577 = vadd.f32 0.0, %v576
        %v578 = vpop.f32.mrb[0].mxu0
        %579 = vdwg.mxu0
        %v580 = vadd.f32 %v506, %v577
        %581 = vst.msk [vmem:[#allocation4] sm:$0xff] %vm399, %v580
        %582 = vst.msk [vmem:[#allocation2] sm:$0xff] %vm498, %v480
        %583 = vrot.lane.b32.xlu0 %v392, 120
        %v584 = vpop.permute.xlu0 %583
        %585 = vrot.lane.b32.xlu0 %v390, 120
        %v586 = vpop.permute.xlu0 %585
        %v587 = vsel %vm399, %v584, 0
        %v589 = vsel %vm399, %v586, 0
        %591 = vmatprep.subr.mxu0 0.0
        %592 = vmatpush1.xpose.msra.mxu0 %v589
        %593 = vmatprep.subr.mxu0 0.0
        %594 = vmatpush1.xpose.msra.mxu0 0.0
        %595 = vmatprep.subr.mxu0 0.0
        %596 = vmatpush1.xpose.msra.mxu0 0.0
        %597 = vmatprep.subr.mxu0 0.0
        %598 = vmatpush1.xpose.msra.mxu0 0.0
        %599 = vmatprep.subr.mxu0 0.0
        %600 = vmatpush1.xpose.msra.mxu0 0.0
        %601 = vmatprep.subr.mxu0 0.0
        %602 = vmatpush1.xpose.msra.mxu0 0.0
        %603 = vmatprep.subr.mxu0 0.0
        %604 = vmatpush1.xpose.msra.mxu0 0.0
        %605 = vmatprep.subr.mxu0 0.0
        %606 = vmatpush1.xpose.msra.mxu0 0.0
        %607 = vmatprep.subr.mxu0 0.0
        %608 = vmatpush1.xpose.msra.mxu0 0.0
        %609 = vmatprep.subr.mxu0 0.0
        %610 = vmatpush1.xpose.msra.mxu0 0.0
        %611 = vmatprep.subr.mxu0 0.0
        %612 = vmatpush1.xpose.msra.mxu0 0.0
        %613 = vmatprep.subr.mxu0 0.0
        %614 = vmatpush1.xpose.msra.mxu0 0.0
        %615 = vmatprep.subr.mxu0 0.0
        %616 = vmatpush1.xpose.msra.mxu0 0.0
        %617 = vmatprep.subr.mxu0 0.0
        %618 = vmatpush1.xpose.msra.mxu0 0.0
        %619 = vmatprep.subr.mxu0 0.0
        %620 = vmatpush1.xpose.msra.mxu0 0.0
        %621 = vmatprep.subr.mxu0 0.0
        %622 = vmatpush1.xpose.msra.mxu0 0.0
        %623 = vmatprep.subr.mxu0 0.0
        %624 = vmatpush1.xpose.msra.mxu0 0.0
        %625 = vmatprep.subr.mxu0 0.0
        %626 = vmatpush1.xpose.msra.mxu0 0.0
        %627 = vmatprep.subr.mxu0 0.0
        %628 = vmatpush1.xpose.msra.mxu0 0.0
        %629 = vmatprep.subr.mxu0 0.0
        %630 = vmatpush1.xpose.msra.mxu0 0.0
        %631 = vmatprep.subr.mxu0 0.0
        %632 = vmatpush1.xpose.msra.mxu0 0.0
        %633 = vmatprep.subr.mxu0 0.0
        %634 = vmatpush1.xpose.msra.mxu0 0.0
        %635 = vmatprep.subr.mxu0 0.0
        %636 = vmatpush1.xpose.msra.mxu0 0.0
        %637 = vmatprep.subr.mxu0 0.0
        %638 = vmatpush1.xpose.msra.mxu0 0.0
        %639 = vmatprep.subr.mxu0 0.0
        %640 = vmatpush1.xpose.msra.mxu0 0.0
        %641 = vmatprep.subr.mxu0 0.0
        %642 = vmatpush1.xpose.msra.mxu0 0.0
        %643 = vmatprep.subr.mxu0 0.0
        %644 = vmatpush1.xpose.msra.mxu0 0.0
        %645 = vmatprep.subr.mxu0 0.0
        %646 = vmatpush1.xpose.msra.mxu0 0.0
        %647 = vmatprep.subr.mxu0 0.0
        %648 = vmatpush1.xpose.msra.mxu0 0.0
        %649 = vmatprep.subr.mxu0 0.0
        %650 = vmatpush1.xpose.msra.mxu0 0.0
        %651 = vmatprep.subr.mxu0 0.0
        %652 = vmatpush1.xpose.msra.mxu0 0.0
        %653 = vmatprep.subr.mxu0 0.0
        %654 = vmatpush1.xpose.msra.mxu0 0.0
        %655 = vmatprep.mubr.f32.mxu0 0.0
        %656 = vmatmul.mubr.f32.gmra.mrb[0].mxu0 %v587
        %v657 = vpop.f32.mrb[0].mxu0
        %v658 = vadd.f32 %v397, %v657
        %v659 = vpop.f32.mrb[0].mxu0
        %660 = vdwg.mxu0
        %s661 = scalar_lea.vmem [#allocation2], 8
        %v662 = vld [vmem:[%s661] sm:$0xff]
        %v663 = vsel %vm399, %v658, -inf
        %664 = vmax.xlane.f32.xlu0 %v663
        %v665 = vpop.xlane.xlu0 %664
        %v666 = vmax.f32 %v662, %v665
        %v667 = vsub.f32 %v662, %v666
        %v668 = vmul.f32 %v667, 1.442695
        %v669 = vpow.pop %v668
        %671 = vset.pattern.permute.xlu0 0
        %672 = vperm.xlu0 %671, %v666
        %v673 = vpop.permute.xlu0 %672
        %v675 = vsub.f32 %v658, %v673
        %v676 = vmul.f32 %v675, 1.442695
        %v677 = vpow.pop %v676
        %s678 = scalar_lea.vmem [#allocation3], 8
        %v679 = vld [vmem:[%s678] sm:$0xff]
        %v680 = vmul.f32 %v669, %v679
        %v681 = vsel %vm399, %v677, 0.0
        %682 = vadd.xlane.f32.xlu0 %v681
        %v683 = vpop.xlane.xlu0 %682
        %v684 = vadd.f32 %v680, %v683
        %685 = vst.msk [vmem:[%s678] sm:$0xff] %vm498, %v684
        %s686 = scalar_lea.vmem [#allocation4], 8
        %v687 = vld [vmem:[%s686] sm:$0xff]
        %689 = vset.pattern.permute.xlu0 0
        %690 = vperm.xlu0 %689, %v669
        %v691 = vpop.permute.xlu0 %690
        %v693 = vmul.f32 %v691, %v687
        %695 = vrot.lane.b32.xlu0 %v391, 120
        %v696 = vpop.permute.xlu0 %695
        %v699 = vsel %vm399, %v677, 0
        %701 = vmatprep.subr.mxu0 0.0
        %702 = vmatpush1.msra.mxu0 %v696
        %703 = vmatprep.subr.mxu0 0.0
        %704 = vmatpush1.msra.mxu0 0.0
        %705 = vmatprep.subr.mxu0 0.0
        %706 = vmatpush1.msra.mxu0 0.0
        %707 = vmatprep.subr.mxu0 0.0
        %708 = vmatpush1.msra.mxu0 0.0
        %709 = vmatprep.subr.mxu0 0.0
        %710 = vmatpush1.msra.mxu0 0.0
        %711 = vmatprep.subr.mxu0 0.0
        %712 = vmatpush1.msra.mxu0 0.0
        %713 = vmatprep.subr.mxu0 0.0
        %714 = vmatpush1.msra.mxu0 0.0
        %715 = vmatprep.subr.mxu0 0.0
        %716 = vmatpush1.msra.mxu0 0.0
        %717 = vmatprep.subr.mxu0 0.0
        %718 = vmatpush1.msra.mxu0 0.0
        %719 = vmatprep.subr.mxu0 0.0
        %720 = vmatpush1.msra.mxu0 0.0
        %721 = vmatprep.subr.mxu0 0.0
        %722 = vmatpush1.msra.mxu0 0.0
        %723 = vmatprep.subr.mxu0 0.0
        %724 = vmatpush1.msra.mxu0 0.0
        %725 = vmatprep.subr.mxu0 0.0
        %726 = vmatpush1.msra.mxu0 0.0
        %727 = vmatprep.subr.mxu0 0.0
        %728 = vmatpush1.msra.mxu0 0.0
        %729 = vmatprep.subr.mxu0 0.0
        %730 = vmatpush1.msra.mxu0 0.0
        %731 = vmatprep.subr.mxu0 0.0
        %732 = vmatpush1.msra.mxu0 0.0
        %733 = vmatprep.subr.mxu0 0.0
        %734 = vmatpush1.msra.mxu0 0.0
        %735 = vmatprep.subr.mxu0 0.0
        %736 = vmatpush1.msra.mxu0 0.0
        %737 = vmatprep.subr.mxu0 0.0
        %738 = vmatpush1.msra.mxu0 0.0
        %739 = vmatprep.subr.mxu0 0.0
        %740 = vmatpush1.msra.mxu0 0.0
        %741 = vmatprep.subr.mxu0 0.0
        %742 = vmatpush1.msra.mxu0 0.0
        %743 = vmatprep.subr.mxu0 0.0
        %744 = vmatpush1.msra.mxu0 0.0
        %745 = vmatprep.subr.mxu0 0.0
        %746 = vmatpush1.msra.mxu0 0.0
        %747 = vmatprep.subr.mxu0 0.0
        %748 = vmatpush1.msra.mxu0 0.0
        %749 = vmatprep.subr.mxu0 0.0
        %750 = vmatpush1.msra.mxu0 0.0
        %751 = vmatprep.subr.mxu0 0.0
        %752 = vmatpush1.msra.mxu0 0.0
        %753 = vmatprep.subr.mxu0 0.0
        %754 = vmatpush1.msra.mxu0 0.0
        %755 = vmatprep.subr.mxu0 0.0
        %756 = vmatpush1.msra.mxu0 0.0
        %757 = vmatprep.subr.mxu0 0.0
        %758 = vmatpush1.msra.mxu0 0.0
        %759 = vmatprep.subr.mxu0 0.0
        %760 = vmatpush1.msra.mxu0 0.0
        %761 = vmatprep.subr.mxu0 0.0
        %762 = vmatpush1.msra.mxu0 0.0
        %763 = vmatprep.subr.mxu0 0.0
        %764 = vmatpush1.msra.mxu0 0.0
        %765 = vmatprep.mubr.f32.mxu0 0.0
        %766 = vmatmul.mubr.f32.gmra.mrb[0].mxu0 %v699
        %v767 = vpop.f32.mrb[0].mxu0
        %v768 = vadd.f32 0.0, %v767
        %v769 = vpop.f32.mrb[0].mxu0
        %770 = vdwg.mxu0
        %v771 = vadd.f32 %v693, %v768
        %772 = vst.msk [vmem:[%s686] sm:$0xff] %vm399, %v771
        %773 = vst.msk [vmem:[%s661] sm:$0xff] %vm498, %v666
        %774 = vrot.lane.b32.xlu0 %v392, 112
        %v775 = vpop.permute.xlu0 %774
        %776 = vrot.lane.b32.xlu0 %v390, 112
        %v777 = vpop.permute.xlu0 %776
        %v778 = vsel %vm399, %v775, 0
        %v780 = vsel %vm399, %v777, 0
        %782 = vmatprep.subr.mxu0 0.0
        %783 = vmatpush1.xpose.msra.mxu0 %v780
        %784 = vmatprep.subr.mxu0 0.0
        %785 = vmatpush1.xpose.msra.mxu0 0.0
        %786 = vmatprep.subr.mxu0 0.0
        %787 = vmatpush1.xpose.msra.mxu0 0.0
        %788 = vmatprep.subr.mxu0 0.0
        %789 = vmatpush1.xpose.msra.mxu0 0.0
        %790 = vmatprep.subr.mxu0 0.0
        %791 = vmatpush1.xpose.msra.mxu0 0.0
        %792 = vmatprep.subr.mxu0 0.0
        %793 = vmatpush1.xpose.msra.mxu0 0.0
        %794 = vmatprep.subr.mxu0 0.0
        %795 = vmatpush1.xpose.msra.mxu0 0.0
        %796 = vmatprep.subr.mxu0 0.0
        %797 = vmatpush1.xpose.msra.mxu0 0.0
        %798 = vmatprep.subr.mxu0 0.0
        %799 = vmatpush1.xpose.msra.mxu0 0.0
        %800 = vmatprep.subr.mxu0 0.0
        %801 = vmatpush1.xpose.msra.mxu0 0.0
        %802 = vmatprep.subr.mxu0 0.0
        %803 = vmatpush1.xpose.msra.mxu0 0.0
        %804 = vmatprep.subr.mxu0 0.0
        %805 = vmatpush1.xpose.msra.mxu0 0.0
        %806 = vmatprep.subr.mxu0 0.0
        %807 = vmatpush1.xpose.msra.mxu0 0.0
        %808 = vmatprep.subr.mxu0 0.0
        %809 = vmatpush1.xpose.msra.mxu0 0.0
        %810 = vmatprep.subr.mxu0 0.0
        %811 = vmatpush1.xpose.msra.mxu0 0.0
        %812 = vmatprep.subr.mxu0 0.0
        %813 = vmatpush1.xpose.msra.mxu0 0.0
        %814 = vmatprep.subr.mxu0 0.0
        %815 = vmatpush1.xpose.msra.mxu0 0.0
        %816 = vmatprep.subr.mxu0 0.0
        %817 = vmatpush1.xpose.msra.mxu0 0.0
        %818 = vmatprep.subr.mxu0 0.0
        %819 = vmatpush1.xpose.msra.mxu0 0.0
        %820 = vmatprep.subr.mxu0 0.0
        %821 = vmatpush1.xpose.msra.mxu0 0.0
        %822 = vmatprep.subr.mxu0 0.0
        %823 = vmatpush1.xpose.msra.mxu0 0.0
        %824 = vmatprep.subr.mxu0 0.0
        %825 = vmatpush1.xpose.msra.mxu0 0.0
        %826 = vmatprep.subr.mxu0 0.0
        %827 = vmatpush1.xpose.msra.mxu0 0.0
        %828 = vmatprep.subr.mxu0 0.0
        %829 = vmatpush1.xpose.msra.mxu0 0.0
        %830 = vmatprep.subr.mxu0 0.0
        %831 = vmatpush1.xpose.msra.mxu0 0.0
        %832 = vmatprep.subr.mxu0 0.0
        %833 = vmatpush1.xpose.msra.mxu0 0.0
        %834 = vmatprep.subr.mxu0 0.0
        %835 = vmatpush1.xpose.msra.mxu0 0.0
        %836 = vmatprep.subr.mxu0 0.0
        %837 = vmatpush1.xpose.msra.mxu0 0.0
        %838 = vmatprep.subr.mxu0 0.0
        %839 = vmatpush1.xpose.msra.mxu0 0.0
        %840 = vmatprep.subr.mxu0 0.0
        %841 = vmatpush1.xpose.msra.mxu0 0.0
        %842 = vmatprep.subr.mxu0 0.0
        %843 = vmatpush1.xpose.msra.mxu0 0.0
        %844 = vmatprep.subr.mxu0 0.0
        %845 = vmatpush1.xpose.msra.mxu0 0.0
        %846 = vmatprep.mubr.f32.mxu0 0.0
        %847 = vmatmul.mubr.f32.gmra.mrb[0].mxu0 %v778
        %v848 = vpop.f32.mrb[0].mxu0
        %v849 = vadd.f32 %v397, %v848
        %v850 = vpop.f32.mrb[0].mxu0
        %851 = vdwg.mxu0
        %s852 = scalar_lea.vmem [#allocation2], 16
        %v853 = vld [vmem:[%s852] sm:$0xff]
        %v854 = vsel %vm399, %v849, -inf
        %855 = vmax.xlane.f32.xlu0 %v854
        %v856 = vpop.xlane.xlu0 %855
        %v857 = vmax.f32 %v853, %v856
        %v858 = vsub.f32 %v853, %v857
        %v859 = vmul.f32 %v858, 1.442695
        %v860 = vpow.pop %v859
        %862 = vset.pattern.permute.xlu0 0
        %863 = vperm.xlu0 %862, %v857
        %v864 = vpop.permute.xlu0 %863
        %v866 = vsub.f32 %v849, %v864
        %v867 = vmul.f32 %v866, 1.442695
        %v868 = vpow.pop %v867
        %s869 = scalar_lea.vmem [#allocation3], 16
        %v870 = vld [vmem:[%s869] sm:$0xff]
        %v871 = vmul.f32 %v860, %v870
        %v872 = vsel %vm399, %v868, 0.0
        %873 = vadd.xlane.f32.xlu0 %v872
        %v874 = vpop.xlane.xlu0 %873
        %v875 = vadd.f32 %v871, %v874
        %876 = vst.msk [vmem:[%s869] sm:$0xff] %vm498, %v875
        %s877 = scalar_lea.vmem [#allocation4], 16
        %v878 = vld [vmem:[%s877] sm:$0xff]
        %880 = vset.pattern.permute.xlu0 0
        %881 = vperm.xlu0 %880, %v860
        %v882 = vpop.permute.xlu0 %881
        %v884 = vmul.f32 %v882, %v878
        %885 = vrot.lane.b32.xlu0 %v391, 112
        %v886 = vpop.permute.xlu0 %885
        %v889 = vsel %vm399, %v868, 0
        %891 = vmatprep.subr.mxu0 0.0
        %892 = vmatpush1.msra.mxu0 %v886
        %893 = vmatprep.subr.mxu0 0.0
        %894 = vmatpush1.msra.mxu0 0.0
        %895 = vmatprep.subr.mxu0 0.0
        %896 = vmatpush1.msra.mxu0 0.0
        %897 = vmatprep.subr.mxu0 0.0
        %898 = vmatpush1.msra.mxu0 0.0
        %899 = vmatprep.subr.mxu0 0.0
        %900 = vmatpush1.msra.mxu0 0.0
        %901 = vmatprep.subr.mxu0 0.0
        %902 = vmatpush1.msra.mxu0 0.0
        %903 = vmatprep.subr.mxu0 0.0
        %904 = vmatpush1.msra.mxu0 0.0
        %905 = vmatprep.subr.mxu0 0.0
        %906 = vmatpush1.msra.mxu0 0.0
        %907 = vmatprep.subr.mxu0 0.0
        %908 = vmatpush1.msra.mxu0 0.0
        %909 = vmatprep.subr.mxu0 0.0
        %910 = vmatpush1.msra.mxu0 0.0
        %911 = vmatprep.subr.mxu0 0.0
        %912 = vmatpush1.msra.mxu0 0.0
        %913 = vmatprep.subr.mxu0 0.0
        %914 = vmatpush1.msra.mxu0 0.0
        %915 = vmatprep.subr.mxu0 0.0
        %916 = vmatpush1.msra.mxu0 0.0
        %917 = vmatprep.subr.mxu0 0.0
        %918 = vmatpush1.msra.mxu0 0.0
        %919 = vmatprep.subr.mxu0 0.0
        %920 = vmatpush1.msra.mxu0 0.0
        %921 = vmatprep.subr.mxu0 0.0
        %922 = vmatpush1.msra.mxu0 0.0
        %923 = vmatprep.subr.mxu0 0.0
        %924 = vmatpush1.msra.mxu0 0.0
        %925 = vmatprep.subr.mxu0 0.0
        %926 = vmatpush1.msra.mxu0 0.0
        %927 = vmatprep.subr.mxu0 0.0
        %928 = vmatpush1.msra.mxu0 0.0
        %929 = vmatprep.subr.mxu0 0.0
        %930 = vmatpush1.msra.mxu0 0.0
        %931 = vmatprep.subr.mxu0 0.0
        %932 = vmatpush1.msra.mxu0 0.0
        %933 = vmatprep.subr.mxu0 0.0
        %934 = vmatpush1.msra.mxu0 0.0
        %935 = vmatprep.subr.mxu0 0.0
        %936 = vmatpush1.msra.mxu0 0.0
        %937 = vmatprep.subr.mxu0 0.0
        %938 = vmatpush1.msra.mxu0 0.0
        %939 = vmatprep.subr.mxu0 0.0
        %940 = vmatpush1.msra.mxu0 0.0
        %941 = vmatprep.subr.mxu0 0.0
        %942 = vmatpush1.msra.mxu0 0.0
        %943 = vmatprep.subr.mxu0 0.0
        %944 = vmatpush1.msra.mxu0 0.0
        %945 = vmatprep.subr.mxu0 0.0
        %946 = vmatpush1.msra.mxu0 0.0
        %947 = vmatprep.subr.mxu0 0.0
        %948 = vmatpush1.msra.mxu0 0.0
        %949 = vmatprep.subr.mxu0 0.0
        %950 = vmatpush1.msra.mxu0 0.0
        %951 = vmatprep.subr.mxu0 0.0
        %952 = vmatpush1.msra.mxu0 0.0
        %953 = vmatprep.subr.mxu0 0.0
        %954 = vmatpush1.msra.mxu0 0.0
        %955 = vmatprep.mubr.f32.mxu0 0.0
        %956 = vmatmul.mubr.f32.gmra.mrb[0].mxu0 %v889
        %v957 = vpop.f32.mrb[0].mxu0
        %v958 = vadd.f32 0.0, %v957
        %v959 = vpop.f32.mrb[0].mxu0
        %960 = vdwg.mxu0
        %v961 = vadd.f32 %v884, %v958
        %962 = vst.msk [vmem:[%s877] sm:$0xff] %vm399, %v961
        %963 = vst.msk [vmem:[%s852] sm:$0xff] %vm498, %v857
        %964 = vrot.lane.b32.xlu0 %v392, 104
        %v965 = vpop.permute.xlu0 %964
        %966 = vrot.lane.b32.xlu0 %v390, 104
        %v967 = vpop.permute.xlu0 %966
        %v968 = vsel %vm399, %v965, 0
        %v970 = vsel %vm399, %v967, 0
        %972 = vmatprep.subr.mxu0 0.0
        %973 = vmatpush1.xpose.msra.mxu0 %v970
        %974 = vmatprep.subr.mxu0 0.0
        %975 = vmatpush1.xpose.msra.mxu0 0.0
        %976 = vmatprep.subr.mxu0 0.0
        %977 = vmatpush1.xpose.msra.mxu0 0.0
        %978 = vmatprep.subr.mxu0 0.0
        %979 = vmatpush1.xpose.msra.mxu0 0.0
        %980 = vmatprep.subr.mxu0 0.0
        %981 = vmatpush1.xpose.msra.mxu0 0.0
        %982 = vmatprep.subr.mxu0 0.0
        %983 = vmatpush1.xpose.msra.mxu0 0.0
        %984 = vmatprep.subr.mxu0 0.0
        %985 = vmatpush1.xpose.msra.mxu0 0.0
        %986 = vmatprep.subr.mxu0 0.0
        %987 = vmatpush1.xpose.msra.mxu0 0.0
        %988 = vmatprep.subr.mxu0 0.0
        %989 = vmatpush1.xpose.msra.mxu0 0.0
        %990 = vmatprep.subr.mxu0 0.0
        %991 = vmatpush1.xpose.msra.mxu0 0.0
        %992 = vmatprep.subr.mxu0 0.0
        %993 = vmatpush1.xpose.msra.mxu0 0.0
        %994 = vmatprep.subr.mxu0 0.0
        %995 = vmatpush1.xpose.msra.mxu0 0.0
        %996 = vmatprep.subr.mxu0 0.0
        %997 = vmatpush1.xpose.msra.mxu0 0.0
        %998 = vmatprep.subr.mxu0 0.0
        %999 = vmatpush1.xpose.msra.mxu0 0.0
        %1000 = vmatprep.subr.mxu0 0.0
        %1001 = vmatpush1.xpose.msra.mxu0 0.0
        %1002 = vmatprep.subr.mxu0 0.0
        %1003 = vmatpush1.xpose.msra.mxu0 0.0
        %1004 = vmatprep.subr.mxu0 0.0
        %1005 = vmatpush1.xpose.msra.mxu0 0.0
        %1006 = vmatprep.subr.mxu0 0.0
        %1007 = vmatpush1.xpose.msra.mxu0 0.0
        %1008 = vmatprep.subr.mxu0 0.0
        %1009 = vmatpush1.xpose.msra.mxu0 0.0
        %1010 = vmatprep.subr.mxu0 0.0
        %1011 = vmatpush1.xpose.msra.mxu0 0.0
        %1012 = vmatprep.subr.mxu0 0.0
        %1013 = vmatpush1.xpose.msra.mxu0 0.0
        %1014 = vmatprep.subr.mxu0 0.0
        %1015 = vmatpush1.xpose.msra.mxu0 0.0
        %1016 = vmatprep.subr.mxu0 0.0
        %1017 = vmatpush1.xpose.msra.mxu0 0.0
        %1018 = vmatprep.subr.mxu0 0.0
        %1019 = vmatpush1.xpose.msra.mxu0 0.0
        %1020 = vmatprep.subr.mxu0 0.0
        %1021 = vmatpush1.xpose.msra.mxu0 0.0
        %1022 = vmatprep.subr.mxu0 0.0
        %1023 = vmatpush1.xpose.msra.mxu0 0.0
        %1024 = vmatprep.subr.mxu0 0.0
        %1025 = vmatpush1.xpose.msra.mxu0 0.0
        %1026 = vmatprep.subr.mxu0 0.0
        %1027 = vmatpush1.xpose.msra.mxu0 0.0
        %1028 = vmatprep.subr.mxu0 0.0
        %1029 = vmatpush1.xpose.msra.mxu0 0.0
        %1030 = vmatprep.subr.mxu0 0.0
        %1031 = vmatpush1.xpose.msra.mxu0 0.0
        %1032 = vmatprep.subr.mxu0 0.0
        %1033 = vmatpush1.xpose.msra.mxu0 0.0
        %1034 = vmatprep.subr.mxu0 0.0
        %1035 = vmatpush1.xpose.msra.mxu0 0.0
        %1036 = vmatprep.mubr.f32.mxu0 0.0
        %1037 = vmatmul.mubr.f32.gmra.mrb[0].mxu0 %v968
        %v1038 = vpop.f32.mrb[0].mxu0
        %v1039 = vadd.f32 %v397, %v1038
        %v1040 = vpop.f32.mrb[0].mxu0
        %1041 = vdwg.mxu0
        %s1042 = scalar_lea.vmem [#allocation2], 24
        %v1043 = vld [vmem:[%s1042] sm:$0xff]
        %v1044 = vsel %vm399, %v1039, -inf
        %1045 = vmax.xlane.f32.xlu0 %v1044
        %v1046 = vpop.xlane.xlu0 %1045
        %v1047 = vmax.f32 %v1043, %v1046
        %v1048 = vsub.f32 %v1043, %v1047
        %v1049 = vmul.f32 %v1048, 1.442695
        %v1050 = vpow.pop %v1049
        %1052 = vset.pattern.permute.xlu0 0
        %1053 = vperm.xlu0 %1052, %v1047
        %v1054 = vpop.permute.xlu0 %1053
        %v1056 = vsub.f32 %v1039, %v1054
        %v1057 = vmul.f32 %v1056, 1.442695
        %v1058 = vpow.pop %v1057
        %s1059 = scalar_lea.vmem [#allocation3], 24
        %v1060 = vld [vmem:[%s1059] sm:$0xff]
        %v1061 = vmul.f32 %v1050, %v1060
        %v1062 = vsel %vm399, %v1058, 0.0
        %1063 = vadd.xlane.f32.xlu0 %v1062
        %v1064 = vpop.xlane.xlu0 %1063
        %v1065 = vadd.f32 %v1061, %v1064
        %1066 = vst.msk [vmem:[%s1059] sm:$0xff] %vm498, %v1065
        %s1067 = scalar_lea.vmem [#allocation4], 24
        %v1068 = vld [vmem:[%s1067] sm:$0xff]
        %1070 = vset.pattern.permute.xlu0 0
        %1071 = vperm.xlu0 %1070, %v1050
        %v1072 = vpop.permute.xlu0 %1071
        %v1074 = vmul.f32 %v1072, %v1068
        %1075 = vrot.lane.b32.xlu0 %v391, 104
        %v1076 = vpop.permute.xlu0 %1075
        %v1079 = vsel %vm399, %v1058, 0
        %1081 = vmatprep.subr.mxu0 0.0
        %1082 = vmatpush1.msra.mxu0 %v1076
        %1083 = vmatprep.subr.mxu0 0.0
        %1084 = vmatpush1.msra.mxu0 0.0
        %1085 = vmatprep.subr.mxu0 0.0
        %1086 = vmatpush1.msra.mxu0 0.0
        %1087 = vmatprep.subr.mxu0 0.0
        %1088 = vmatpush1.msra.mxu0 0.0
        %1089 = vmatprep.subr.mxu0 0.0
        %1090 = vmatpush1.msra.mxu0 0.0
        %1091 = vmatprep.subr.mxu0 0.0
        %1092 = vmatpush1.msra.mxu0 0.0
        %1093 = vmatprep.subr.mxu0 0.0
        %1094 = vmatpush1.msra.mxu0 0.0
        %1095 = vmatprep.subr.mxu0 0.0
        %1096 = vmatpush1.msra.mxu0 0.0
        %1097 = vmatprep.subr.mxu0 0.0
        %1098 = vmatpush1.msra.mxu0 0.0
        %1099 = vmatprep.subr.mxu0 0.0
        %1100 = vmatpush1.msra.mxu0 0.0
        %1101 = vmatprep.subr.mxu0 0.0
        %1102 = vmatpush1.msra.mxu0 0.0
        %1103 = vmatprep.subr.mxu0 0.0
        %1104 = vmatpush1.msra.mxu0 0.0
        %1105 = vmatprep.subr.mxu0 0.0
        %1106 = vmatpush1.msra.mxu0 0.0
        %1107 = vmatprep.subr.mxu0 0.0
        %1108 = vmatpush1.msra.mxu0 0.0
        %1109 = vmatprep.subr.mxu0 0.0
        %1110 = vmatpush1.msra.mxu0 0.0
        %1111 = vmatprep.subr.mxu0 0.0
        %1112 = vmatpush1.msra.mxu0 0.0
        %1113 = vmatprep.subr.mxu0 0.0
        %1114 = vmatpush1.msra.mxu0 0.0
        %1115 = vmatprep.subr.mxu0 0.0
        %1116 = vmatpush1.msra.mxu0 0.0
        %1117 = vmatprep.subr.mxu0 0.0
        %1118 = vmatpush1.msra.mxu0 0.0
        %1119 = vmatprep.subr.mxu0 0.0
        %1120 = vmatpush1.msra.mxu0 0.0
        %1121 = vmatprep.subr.mxu0 0.0
        %1122 = vmatpush1.msra.mxu0 0.0
        %1123 = vmatprep.subr.mxu0 0.0
        %1124 = vmatpush1.msra.mxu0 0.0
        %1125 = vmatprep.subr.mxu0 0.0
        %1126 = vmatpush1.msra.mxu0 0.0
        %1127 = vmatprep.subr.mxu0 0.0
        %1128 = vmatpush1.msra.mxu0 0.0
        %1129 = vmatprep.subr.mxu0 0.0
        %1130 = vmatpush1.msra.mxu0 0.0
        %1131 = vmatprep.subr.mxu0 0.0
        %1132 = vmatpush1.msra.mxu0 0.0
        %1133 = vmatprep.subr.mxu0 0.0
        %1134 = vmatpush1.msra.mxu0 0.0
        %1135 = vmatprep.subr.mxu0 0.0
        %1136 = vmatpush1.msra.mxu0 0.0
        %1137 = vmatprep.subr.mxu0 0.0
        %1138 = vmatpush1.msra.mxu0 0.0
        %1139 = vmatprep.subr.mxu0 0.0
        %1140 = vmatpush1.msra.mxu0 0.0
        %1141 = vmatprep.subr.mxu0 0.0
        %1142 = vmatpush1.msra.mxu0 0.0
        %1143 = vmatprep.subr.mxu0 0.0
        %1144 = vmatpush1.msra.mxu0 0.0
        %1145 = vmatprep.mubr.f32.mxu0 0.0
        %1146 = vmatmul.mubr.f32.gmra.mrb[0].mxu0 %v1079
        %v1147 = vpop.f32.mrb[0].mxu0
        %v1148 = vadd.f32 0.0, %v1147
        %v1149 = vpop.f32.mrb[0].mxu0
        %1150 = vdwg.mxu0
        %v1151 = vadd.f32 %v1074, %v1148
        %1152 = vst.msk [vmem:[%s1067] sm:$0xff] %vm399, %v1151
        %1153 = vst.msk [vmem:[%s1042] sm:$0xff] %vm498, %v1047
        // Predicated region
        $region57: #{multi_head_attention.8} parent=35 // pred_check
          %p1154 = pneg %p369
        $region58: #{multi_head_attention.8} parent=35 // pred_check_branch
          %1156 = sbr.rel (%p1154) target = $region60
        $region59: #{multi_head_attention.8} parent=35 // pred_region
          %v1157 = vld [vmem:[#allocation3] sm:$0xff]
          %v1158 = vrcp.pop %v1157
          %v1159 = vld [vmem:[#allocation4] sm:$0xff]
          %1161 = vset.pattern.permute.xlu0 0
          %1162 = vperm.xlu0 %1161, %v1158
          %v1163 = vpop.permute.xlu0 %1162
          %v1165 = vmul.f32 %v1159, %v1163
          %v1166 = vld [vmem:[%s678] sm:$0xff]
          %v1167 = vrcp.pop %v1166
          %v1168 = vld [vmem:[%s686] sm:$0xff]
          %1170 = vset.pattern.permute.xlu0 0
          %1171 = vperm.xlu0 %1170, %v1167
          %v1172 = vpop.permute.xlu0 %1171
          %v1174 = vmul.f32 %v1168, %v1172
          %v1175 = vld [vmem:[%s869] sm:$0xff]
          %v1176 = vrcp.pop %v1175
          %v1177 = vld [vmem:[%s877] sm:$0xff]
          %1179 = vset.pattern.permute.xlu0 0
          %1180 = vperm.xlu0 %1179, %v1176
          %v1181 = vpop.permute.xlu0 %1180
          %v1183 = vmul.f32 %v1177, %v1181
          %v1184 = vld [vmem:[%s1059] sm:$0xff]
          %v1185 = vrcp.pop %v1184
          %v1186 = vld [vmem:[%s1067] sm:$0xff]
          %1188 = vset.pattern.permute.xlu0 0
          %1189 = vperm.xlu0 %1188, %v1185
          %v1190 = vpop.permute.xlu0 %1189
          %v1192 = vmul.f32 %v1186, %v1190
          %1194 = vrot.lane.b32.xlu0 %v1174, 8
          %v1195 = vpop.permute.xlu0 %1194
          %1198 = vrot.lane.b32.xlu0 %v1183, 16
          %v1199 = vpop.permute.xlu0 %1198
          %1202 = vrot.lane.b32.xlu0 %v1192, 24
          %v1203 = vpop.permute.xlu0 %1202
          %v1205 = vsel %vm399, %v1165, %v1195
          %vm1206 = vcmask 130048
          %v1207 = vsel %vm1206, %v1205, %v1199
          %vm1208 = vcmask 195584
          %v1209 = vsel %vm1208, %v1207, %v1203
          %vm1210 = vcmask 261120
          %1211 = vst.msk [vmem:[%s368] sm:$0xff] %vm1210, %v1209
        $region60: #{multi_head_attention.8} parent=35 // pred_fallthru
          _
        %s1212 = sand.u32 %s183, 1
        %s1213 = scalar_lea.sflag [#allocation7], %s1212
        %s1214 = sand.u32 %s183, 1
        %s1215 = smul.addr %s1214, 8
        %s1216 = scalar_lea.vmem [#allocation13], %s1215
        // Predicated region
        $region61: #{multi_head_attention.8} parent=35 // pred_check
          %p1217 = pneg %p193
        $region62: #{multi_head_attention.8} parent=35 // pred_check_branch
          %1219 = sbr.rel (%p1217) target = $region64
        $region63: #{multi_head_attention.8} parent=35 // pred_region
          %s1221 = ssub.s32 128, 128
          %1222 = vsyncadd %s1213, %s1221
          %s1223 = sadd.s32 %s34, %s35
          %s1224 = sadd.s32 %s1223, %s33
          %s1225 = smul.addr %s1224, 128
          %s1226 = scalar_lea.hbm %s4, %s1225
          %s1228 = sshll.u32 %s1216, 4
          %s1229 = int_to_ptr.vmem [resolvable:$true] %s1228
          %1231 = dma.vmem_to_hbm [thread:$0]  %s1229, 128, %s1226, %s1213
        $region64: #{multi_head_attention.8} parent=35 // pred_fallthru
          _
      $region36: #{multi_head_attention.8} parent=5 // pred_fallthru
        _
      %p1232 = scmp.le.s32.totalorder 2, %s22
      // Predicated region
      $region65: #{multi_head_attention.8} parent=5 // pred_check
        %p1233 = pneg %p1232
      $region66: #{multi_head_attention.8} parent=5 // pred_check_branch
        %1235 = sbr.rel (%p1233) target = $region68
      $region67: #{multi_head_attention.8} parent=5 // pred_region
        %s1236 = ssub.s32 %s22, 2
        // Predicated region
        $region69: #{multi_head_attention.8} parent=67 // pred_check
          %p1237 = pneg %p199
        $region70: #{multi_head_attention.8} parent=67 // pred_check_branch
          %1239 = sbr.rel (%p1237) target = $region72
        $region71: #{multi_head_attention.8} parent=67 // pred_region
          %s1240 = sand.u32 %s184, 1
          %s1241 = scalar_lea.sflag [#allocation7], %s1240
          %s1242 = sand.u32 %s184, 1
          %s1243 = smul.addr %s1242, 8
          %s1244 = scalar_lea.vmem [#allocation13], %s1243
          %1245 = dma.done %s1241, 128
        $region72: #{multi_head_attention.8} parent=67 // pred_fallthru
          _
      $region68: #{multi_head_attention.8} parent=5 // pred_fallthru
        _
    $region6: #{multi_head_attention.8} parent=1 // loop_footer
      %s26 = sadd.s32 1, %s22
    $region7: #{multi_head_attention.8} parent=1 // loop_footer_branch
      %21 = sbr.rel target = $region3
    $region8: #{multi_head_attention.8} parent=1 // loop_exit
      _
    %1246 = vsyncpa [#allocation6], 1
    %s1247 = scalar_lea.sflag [#allocation6], 1
    %1248 = vsyncpa %s1247, 1
    %1249 = vsyncpa [#allocation9], 1
    %s1250 = scalar_lea.sflag [#allocation9], 1
    %1251 = vsyncpa %s1250, 1
    %1252 = vsyncpa [#allocation12], 1
    %s1253 = scalar_lea.sflag [#allocation12], 1
    %1254 = vsyncpa %s1253, 1
    %1255 = vsyncpa [#allocation7], 1
    %s1256 = scalar_lea.sflag [#allocation7], 1
    %1257 = vsyncpa %s1256, 1

</llo_original>
